<compile_context>
chip_gen: v5e
topology: v5e:2x2
jax: 0.10.0
libtpu: 0.0.40
codegen_flags: <defaults>
</compile_context>

<pallas_src>
import jax
import jax.numpy as jnp
from jax.experimental import pallas as pl
from jax.experimental.pallas import tpu as pltpu

_HIDDEN = 32


def _round_up(x, m):
    return (x + m - 1) // m * m


def _choose_tb(B, tb_max):
    """Largest multiple-of-8 row tile <= tb_max that still leaves >= 2 grid
    steps (so v7x's two TensorCores both get work)."""
    Bp8 = _round_up(max(B, 1), 8)
    if Bp8 <= 8:
        return 8
    half = _round_up(pl.cdiv(Bp8, 2), 8)
    return max(8, min(tb_max, half))


def _mlp_kernel(xa_ref, xf_ref, w1a_ref, w1f_ref, b1_ref,
                w2_ref, b2_ref, w3_ref, b3_ref, o_ref):
    # fc1: torch.cat fused as a split matmul (identical math, no concat copy).
    h1 = jnp.dot(xa_ref[...], w1a_ref[...], preferred_element_type=jnp.float32)
    h1 = h1 + jnp.dot(xf_ref[...], w1f_ref[...],
                      preferred_element_type=jnp.float32)
    h1 = jax.nn.sigmoid(h1 + b1_ref[...])

    h2 = jnp.dot(h1, w2_ref[...], preferred_element_type=jnp.float32)
    h2 = jax.nn.sigmoid(h2 + b2_ref[...])

    o = jnp.dot(h2, w3_ref[...], preferred_element_type=jnp.float32)
    o_ref[...] = (o + b3_ref[...]).astype(o_ref.dtype)   # (tb, out_dim) store


def predict_net_1_forward_batched(action, obs_feature, params, *, tb_max=4096):
    """action: (B, A), obs_feature: (B, F) -> (B, out_dim) float32."""
    B, A = action.shape
    F = obs_feature.shape[1]
    out_dim = params["w3"].shape[1]

    tb = _choose_tb(B, tb_max)
    grid = (pl.cdiv(B, tb),)           # ragged last tile handled by Pallas masking

    row = lambda d: pl.BlockSpec((tb, d), lambda i: (i, 0))
    resident = lambda arr: pl.BlockSpec(arr.shape, lambda i: (0, 0))

    return pl.pallas_call(
        _mlp_kernel,
        out_shape=jax.ShapeDtypeStruct((B, out_dim), jnp.float32),
        grid=grid,
        in_specs=[
            row(A), row(F),
            resident(params["w1a"]), resident(params["w1f"]), resident(params["b1"]),
            resident(params["w2"]), resident(params["b2"]),
            resident(params["w3"]), resident(params["b3"]),
        ],
        out_specs=pl.BlockSpec((tb, out_dim), lambda i: (i, 0)),
        compiler_params=pltpu.CompilerParams(
            dimension_semantics=("parallel",)),
    )(action.astype(jnp.float32), obs_feature.astype(jnp.float32),
      params["w1a"], params["w1f"], params["b1"],
      params["w2"], params["b2"], params["w3"], params["b3"])


def predict_net_1_forward(action, obs_feature, params):
    """Single-sample forward matching the PyTorch signature:
    action (A,), obs_feature (F,) -> (out_dim,).
    A 1-row Pallas launch is pure overhead, so this uses a fused XLA dot chain."""
    w1 = jnp.concatenate([params["w1a"], params["w1f"]], axis=0)
    x = jnp.concatenate([action, obs_feature], axis=0).astype(jnp.float32)
    h1 = jax.nn.sigmoid(x @ w1 + params["b1"][0])
    h2 = jax.nn.sigmoid(h1 @ params["w2"] + params["b2"][0])
    return h2 @ params["w3"] + params["b3"][0]


def init_params(key, action_dim, obs_feature_dim, output_dim, hidden=_HIDDEN):
    """Deterministic synthetic init.  Weights are stored as (in, out) = torch W.T,
    fc1 split into (action, obs) halves so the kernel can fuse the concat.
    Everything float32 (matches PyTorch's fc1(x.float()) precision)."""
    in_dim = action_dim + obs_feature_dim
    ks = jax.random.split(key, 6)
    s1 = 1.0 / jnp.sqrt(in_dim)
    s2 = 1.0 / jnp.sqrt(hidden)
    w1 = jax.random.uniform(ks[0], (in_dim, hidden), jnp.float32, -s1, s1)
    b1 = jax.random.uniform(ks[1], (1, hidden), jnp.float32, -s1, s1)
    w2 = jax.random.uniform(ks[2], (hidden, hidden), jnp.float32, -s2, s2)
    b2 = jax.random.uniform(ks[3], (1, hidden), jnp.float32, -s2, s2)
    w3 = jax.random.uniform(ks[4], (hidden, output_dim), jnp.float32, -s2, s2)
    b3 = jax.random.uniform(ks[5], (1, output_dim), jnp.float32, -s2, s2)
    return {
        "w1a": w1[:action_dim], "w1f": w1[action_dim:], "b1": b1,
        "w2": w2, "b2": b2, "w3": w3, "b3": b3,
    }


def _reference(xa, xf, params):
    """Pure-JAX reference with identical f32 math."""
    w1 = jnp.concatenate([params["w1a"], params["w1f"]], axis=0)
    x = jnp.concatenate([xa, xf], axis=-1).astype(jnp.float32)
    h1 = jax.nn.sigmoid(
        jnp.dot(x, w1, preferred_element_type=jnp.float32) + params["b1"])
    h2 = jax.nn.sigmoid(
        jnp.dot(h1, params["w2"], preferred_element_type=jnp.float32) + params["b2"])
    return jnp.dot(h2, params["w3"], preferred_element_type=jnp.float32) + params["b3"]


if __name__ == "__main__":
    action_dim, obs_feature_dim, output_dim = 4, 28, 8

    key = jax.random.PRNGKey(0)
    k_params, k_act, k_obs = jax.random.split(key, 3)
    params = init_params(k_params, action_dim, obs_feature_dim, output_dim)

    # 1) Batched Pallas path, divisible batch (2 grid steps of 256 rows).
    B = 512
    actions = jax.random.normal(k_act, (B, action_dim), jnp.float32)
    obs_features = jax.random.normal(k_obs, (B, obs_feature_dim), jnp.float32)
    out = jax.block_until_ready(
        predict_net_1_forward_batched(actions, obs_features, params))
    ref = _reference(actions, obs_features, params)
    assert out.shape == (B, output_dim)
    assert jnp.allclose(out, ref, atol=2e-3, rtol=2e-3)

    # 2) Ragged batch: grid = cdiv(B, tb), partial last tile, no jnp.pad copy.
    B2 = 200
    out2 = jax.block_until_ready(
        predict_net_1_forward_batched(actions[:B2], obs_features[:B2], params))
    assert out2.shape == (B2, output_dim)
    assert jnp.allclose(out2, ref[:B2], atol=2e-3, rtol=2e-3)

    # 3) Single-sample path (the exact PyTorch forward signature), no Pallas launch.
    out1 = jax.block_until_ready(
        predict_net_1_forward(actions[0], obs_features[0], params))
    assert out1.shape == (output_dim,)
    assert jnp.allclose(out1, ref[0], atol=2e-3, rtol=2e-3)

    print("KERNEL_OK")
</pallas_src>

<mosaic_0001>
module attributes {stable_mosaic.version = 11 : i64} {
  func.func @_mlp_kernel(%arg0: i32, %arg1: memref<256x4xf32, #tpu.memory_space<vmem>>, %arg2: memref<256x28xf32, #tpu.memory_space<vmem>>, %arg3: memref<4x32xf32, #tpu.memory_space<vmem>>, %arg4: memref<28x32xf32, #tpu.memory_space<vmem>>, %arg5: memref<1x32xf32, #tpu.memory_space<vmem>>, %arg6: memref<32x32xf32, #tpu.memory_space<vmem>>, %arg7: memref<1x32xf32, #tpu.memory_space<vmem>>, %arg8: memref<32x8xf32, #tpu.memory_space<vmem>>, %arg9: memref<1x8xf32, #tpu.memory_space<vmem>>, %arg10: memref<256x8xf32, #tpu.memory_space<vmem>>) attributes {dimension_semantics = [#tpu.dimension_semantics<parallel>], iteration_bounds = array<i64: 2>, scalar_prefetch = 0 : i64, scratch_operands = 0 : i64, tpu.core_type = #tpu.core_type<tc>, window_params = [{transform_indices = @transform_0, window_bounds = array<i64: 256, 4>}, {transform_indices = @transform_1, window_bounds = array<i64: 256, 28>}, {pipeline_mode = #tpu.pipeline_mode<synchronous>, transform_indices = @transform_2, window_bounds = array<i64: 4, 32>}, {pipeline_mode = #tpu.pipeline_mode<synchronous>, transform_indices = @transform_3, window_bounds = array<i64: 28, 32>}, {pipeline_mode = #tpu.pipeline_mode<synchronous>, transform_indices = @transform_4, window_bounds = array<i64: 1, 32>}, {pipeline_mode = #tpu.pipeline_mode<synchronous>, transform_indices = @transform_5, window_bounds = array<i64: 32, 32>}, {pipeline_mode = #tpu.pipeline_mode<synchronous>, transform_indices = @transform_6, window_bounds = array<i64: 1, 32>}, {pipeline_mode = #tpu.pipeline_mode<synchronous>, transform_indices = @transform_7, window_bounds = array<i64: 32, 8>}, {pipeline_mode = #tpu.pipeline_mode<synchronous>, transform_indices = @transform_8, window_bounds = array<i64: 1, 8>}, {transform_indices = @transform_9, window_bounds = array<i64: 256, 8>}]} {
    %c0 = arith.constant 0 : index
    %c0_0 = arith.constant 0 : index
    %0 = vector.load %arg1[%c0, %c0_0] : memref<256x4xf32, #tpu.memory_space<vmem>>, vector<256x4xf32>
    %c0_1 = arith.constant 0 : index
    %c0_2 = arith.constant 0 : index
    %1 = vector.load %arg3[%c0_1, %c0_2] : memref<4x32xf32, #tpu.memory_space<vmem>>, vector<4x32xf32>
    %cst = arith.constant dense<0.000000e+00> : vector<256x32xf32>
    %2 = tpu.matmul %0, %1, %cst {dimension_numbers = #tpu.dot_dimension_numbers<[1], [0], [0], [1], [0, 0, 1, 1], [], []>} : vector<256x4xf32>, vector<4x32xf32>, vector<256x32xf32> -> vector<256x32xf32>
    %c0_3 = arith.constant 0 : index
    %c0_4 = arith.constant 0 : index
    %3 = vector.load %arg2[%c0_3, %c0_4] : memref<256x28xf32, #tpu.memory_space<vmem>>, vector<256x28xf32>
    %c0_5 = arith.constant 0 : index
    %c0_6 = arith.constant 0 : index
    %4 = vector.load %arg4[%c0_5, %c0_6] : memref<28x32xf32, #tpu.memory_space<vmem>>, vector<28x32xf32>
    %cst_7 = arith.constant dense<0.000000e+00> : vector<256x32xf32>
    %5 = tpu.matmul %3, %4, %cst_7 {dimension_numbers = #tpu.dot_dimension_numbers<[1], [0], [0], [1], [0, 0, 1, 1], [], []>} : vector<256x28xf32>, vector<28x32xf32>, vector<256x32xf32> -> vector<256x32xf32>
    %6 = arith.addf %2, %5 : vector<256x32xf32>
    %c0_8 = arith.constant 0 : index
    %c0_9 = arith.constant 0 : index
    %7 = vector.load %arg5[%c0_8, %c0_9] : memref<1x32xf32, #tpu.memory_space<vmem>>, vector<1x32xf32>
    %8 = vector.broadcast %7 : vector<1x32xf32> to vector<256x32xf32>
    %9 = arith.addf %6, %8 : vector<256x32xf32>
    %10 = arith.negf %9 : vector<256x32xf32>
    %11 = math.exp %10 : vector<256x32xf32>
    %cst_10 = arith.constant 1.000000e+00 : f32
    %12 = vector.broadcast %cst_10 : f32 to vector<256x32xf32>
    %13 = arith.addf %12, %11 : vector<256x32xf32>
    %14 = arith.divf %12, %13 : vector<256x32xf32>
    %c0_11 = arith.constant 0 : index
    %c0_12 = arith.constant 0 : index
    %15 = vector.load %arg6[%c0_11, %c0_12] : memref<32x32xf32, #tpu.memory_space<vmem>>, vector<32x32xf32>
    %cst_13 = arith.constant dense<0.000000e+00> : vector<256x32xf32>
    %16 = tpu.matmul %14, %15, %cst_13 {dimension_numbers = #tpu.dot_dimension_numbers<[1], [0], [0], [1], [0, 0, 1, 1], [], []>} : vector<256x32xf32>, vector<32x32xf32>, vector<256x32xf32> -> vector<256x32xf32>
    %c0_14 = arith.constant 0 : index
    %c0_15 = arith.constant 0 : index
    %17 = vector.load %arg7[%c0_14, %c0_15] : memref<1x32xf32, #tpu.memory_space<vmem>>, vector<1x32xf32>
    %18 = vector.broadcast %17 : vector<1x32xf32> to vector<256x32xf32>
    %19 = arith.addf %16, %18 : vector<256x32xf32>
    %20 = arith.negf %19 : vector<256x32xf32>
    %21 = math.exp %20 : vector<256x32xf32>
    %cst_16 = arith.constant 1.000000e+00 : f32
    %22 = vector.broadcast %cst_16 : f32 to vector<256x32xf32>
    %23 = arith.addf %22, %21 : vector<256x32xf32>
    %24 = arith.divf %22, %23 : vector<256x32xf32>
    %c0_17 = arith.constant 0 : index
    %c0_18 = arith.constant 0 : index
    %25 = vector.load %arg8[%c0_17, %c0_18] : memref<32x8xf32, #tpu.memory_space<vmem>>, vector<32x8xf32>
    %cst_19 = arith.constant dense<0.000000e+00> : vector<256x8xf32>
    %26 = tpu.matmul %24, %25, %cst_19 {dimension_numbers = #tpu.dot_dimension_numbers<[1], [0], [0], [1], [0, 0, 1, 1], [], []>} : vector<256x32xf32>, vector<32x8xf32>, vector<256x8xf32> -> vector<256x8xf32>
    %c0_20 = arith.constant 0 : index
    %c0_21 = arith.constant 0 : index
    %27 = vector.load %arg9[%c0_20, %c0_21] : memref<1x8xf32, #tpu.memory_space<vmem>>, vector<1x8xf32>
    %28 = vector.broadcast %27 : vector<1x8xf32> to vector<256x8xf32>
    %29 = arith.addf %26, %28 : vector<256x8xf32>
    %c0_22 = arith.constant 0 : index
    %c0_23 = arith.constant 0 : index
    %30 = vector.load %arg10[%c0_22, %c0_23] : memref<256x8xf32, #tpu.memory_space<vmem>>, vector<256x8xf32>
    tpu.vector_store %arg10[%c0_22, %c0_23], %29 {strides = array<i32>} : memref<256x8xf32, #tpu.memory_space<vmem>>, vector<256x8xf32>,
    return
  }
  func.func @transform_0(%arg0: i32) -> (i32, i32) {
    %c0_i32 = arith.constant 0 : i32
    %c0_i32_0 = arith.constant 0 : i32
    return %arg0, %c0_i32 : i32, i32
  }
  func.func @transform_1(%arg0: i32) -> (i32, i32) {
    %c0_i32 = arith.constant 0 : i32
    %c0_i32_0 = arith.constant 0 : i32
    return %arg0, %c0_i32 : i32, i32
  }
  func.func @transform_2(%arg0: i32) -> (i32, i32) {
    %c0_i32 = arith.constant 0 : i32
    %c0_i32_0 = arith.constant 0 : i32
    %c0_i32_1 = arith.constant 0 : i32
    return %c0_i32, %c0_i32_0 : i32, i32
  }
  func.func @transform_3(%arg0: i32) -> (i32, i32) {
    %c0_i32 = arith.constant 0 : i32
    %c0_i32_0 = arith.constant 0 : i32
    %c0_i32_1 = arith.constant 0 : i32
    return %c0_i32, %c0_i32_0 : i32, i32
  }
  func.func @transform_4(%arg0: i32) -> (i32, i32) {
    %c0_i32 = arith.constant 0 : i32
    %c0_i32_0 = arith.constant 0 : i32
    %c0_i32_1 = arith.constant 0 : i32
    return %c0_i32, %c0_i32_0 : i32, i32
  }
  func.func @transform_5(%arg0: i32) -> (i32, i32) {
    %c0_i32 = arith.constant 0 : i32
    %c0_i32_0 = arith.constant 0 : i32
    %c0_i32_1 = arith.constant 0 : i32
    return %c0_i32, %c0_i32_0 : i32, i32
  }
  func.func @transform_6(%arg0: i32) -> (i32, i32) {
    %c0_i32 = arith.constant 0 : i32
    %c0_i32_0 = arith.constant 0 : i32
    %c0_i32_1 = arith.constant 0 : i32
    return %c0_i32, %c0_i32_0 : i32, i32
  }
  func.func @transform_7(%arg0: i32) -> (i32, i32) {
    %c0_i32 = arith.constant 0 : i32
    %c0_i32_0 = arith.constant 0 : i32
    %c0_i32_1 = arith.constant 0 : i32
    return %c0_i32, %c0_i32_0 : i32, i32
  }
  func.func @transform_8(%arg0: i32) -> (i32, i32) {
    %c0_i32 = arith.constant 0 : i32
    %c0_i32_0 = arith.constant 0 : i32
    %c0_i32_1 = arith.constant 0 : i32
    return %c0_i32, %c0_i32_0 : i32, i32
  }
  func.func @transform_9(%arg0: i32) -> (i32, i32) {
    %c0_i32 = arith.constant 0 : i32
    %c0_i32_0 = arith.constant 0 : i32
    return %arg0, %c0_i32 : i32, i32
  }
}

</mosaic_0001>

<llo_original>
// kernel: tpu_custom_call.1
$region0: #{tpu_custom_call.1}
  #allocation0 [shape = 'u32[]', space=smem, size = 0x4, offset = 0x4, fixed_abs, tag = 'smem constant byte address 0x4 - core index']
  #allocation1 [shape = 'u32[72,128]{1,0:T(1,128)}', space=vmem, size = 0x9000, scoped, tag = 'internal scratch']
  %s0 = inlined_call_operand.vmem [shape: f32[512,4], index: 0, kind: input, shape index: {}]
  %s1 = inlined_call_operand.vmem [shape: f32[512,28], index: 1, kind: input, shape index: {}]
  %s2 = inlined_call_operand.vmem [shape: f32[4,32], index: 2, kind: input, shape index: {}]
  %s3 = inlined_call_operand.vmem [shape: f32[28,32], index: 3, kind: input, shape index: {}]
  %s4 = inlined_call_operand.vmem [shape: f32[1,32], index: 4, kind: input, shape index: {}]
  %s5 = inlined_call_operand.vmem [shape: f32[32,32], index: 5, kind: input, shape index: {}]
  %s6 = inlined_call_operand.vmem [shape: f32[1,32], index: 6, kind: input, shape index: {}]
  %s7 = inlined_call_operand.vmem [shape: f32[32,8], index: 7, kind: input, shape index: {}]
  %s8 = inlined_call_operand.vmem [shape: f32[1,8], index: 8, kind: input, shape index: {}]
  %s9 = inlined_call_operand.vmem [shape: f32[512,8], index: 9, kind: output, shape index: {}]
  %s10 = sld [smem:[#allocation0]]
  $region69: #{tpu_custom_call.1} parent=0
    _
  %s12 = ssub.s32 1, %s10
  %s13 = scalar_select 0, %s12, %s10
  loop: start=0, step=1, limit=4
  $region2: #{tpu_custom_call.1} parent=0 // loop_pre_header
    _
  $region3: #{tpu_custom_call.1} parent=0 // loop_header
    %s15 = sphi 0, %s19
    %p16 = scmp.ge.s32.totalorder %s15, 4
    %s25 = sphi 0, %s27
    %s28 = sphi 0, %s25
    %s29 = sphi 0, %s28
    %s45 = sphi 0, %s29
    %s51 = sphi 0, %s53
    %s54 = sphi 0, %s51
    %s55 = sphi 0, %s54
    %s71 = sphi 0, %s55
    %s75 = sphi 0, %s75
    %s77 = sphi 0, %s75
    %s78 = sphi 0, %s77
    %s92 = sphi 0, %s78
    %s96 = sphi 0, %s96
    %s98 = sphi 0, %s96
    %s99 = sphi 0, %s98
    %s113 = sphi 0, %s99
    %s117 = sphi 0, %s117
    %s119 = sphi 0, %s117
    %s120 = sphi 0, %s119
    %s134 = sphi 0, %s120
    %s138 = sphi 0, %s138
    %s140 = sphi 0, %s138
    %s141 = sphi 0, %s140
    %s155 = sphi 0, %s141
    %s159 = sphi 0, %s159
    %s161 = sphi 0, %s159
    %s162 = sphi 0, %s161
    %s176 = sphi 0, %s162
    %s180 = sphi 0, %s180
    %s182 = sphi 0, %s180
    %s183 = sphi 0, %s182
    %s197 = sphi 0, %s183
    %s201 = sphi 0, %s201
    %s203 = sphi 0, %s201
    %s204 = sphi 0, %s203
    %s218 = sphi 0, %s204
    %s224 = sphi 0, %s226
    %s227 = sphi 0, %s224
    %s228 = sphi 0, %s227
    %s244 = sphi 0, %s228
  $region4: #{tpu_custom_call.1} parent=0 // loop_header_branch
    %18 = sbr.rel (%p16) target = $region8
  $region5: #{tpu_custom_call.1} parent=0 // loop_body
    %s20 = ssub.s32 %s15, 1
    %s21 = ssub.s32 %s15, 2
    %s22 = sadd.s32 %s15, 1
    %s23 = ssub.s32 %s15, %s22
    %p24 = scmp.eq.s32.totalorder %s23, 0
    %s26 = sadd.s32 %s25, 1
    %s27 = scalar_select %p24, %s25, %s26
    %p30 = pneg %p24
    %p31 = scmp.eq.s32.totalorder %s15, 1
    %p32 = por %p30, %p31
    %p33 = scmp.ne.s32.totalorder %s25, %s28
    %p34 = scmp.eq.s32.totalorder %s15, 0
    %p35 = por %p33, %p34
    %p36 = scmp.ne.s32.totalorder %s25, %s28
    %p37 = scmp.eq.s32.totalorder %s20, 1
    %p38 = por %p36, %p37
    %p39 = scmp.ne.s32.totalorder %s28, %s29
    %p40 = scmp.eq.s32.totalorder %s20, 0
    %p41 = por %p39, %p40
    %p42 = scmp.ne.s32.totalorder %s28, %s29
    %p43 = scmp.eq.s32.totalorder %s21, 1
    %p44 = por %p42, %p43
    %p46 = scmp.ne.s32.totalorder %s29, %s45
    %p47 = scmp.eq.s32.totalorder %s21, 0
    %p48 = por %p46, %p47
    %s49 = ssub.s32 %s15, %s22
    %p50 = scmp.eq.s32.totalorder %s49, 0
    %s52 = sadd.s32 %s51, 1
    %s53 = scalar_select %p50, %s51, %s52
    %p56 = pneg %p50
    %p57 = scmp.eq.s32.totalorder %s15, 1
    %p58 = por %p56, %p57
    %p59 = scmp.ne.s32.totalorder %s51, %s54
    %p60 = scmp.eq.s32.totalorder %s15, 0
    %p61 = por %p59, %p60
    %p62 = scmp.ne.s32.totalorder %s51, %s54
    %p63 = scmp.eq.s32.totalorder %s20, 1
    %p64 = por %p62, %p63
    %p65 = scmp.ne.s32.totalorder %s54, %s55
    %p66 = scmp.eq.s32.totalorder %s20, 0
    %p67 = por %p65, %p66
    %p68 = scmp.ne.s32.totalorder %s54, %s55
    %p69 = scmp.eq.s32.totalorder %s21, 1
    %p70 = por %p68, %p69
    %p72 = scmp.ne.s32.totalorder %s55, %s71
    %p73 = scmp.eq.s32.totalorder %s21, 0
    %p74 = por %p72, %p73
    %s76 = sadd.s32 %s75, 1
    %p79 = scmp.eq.s32.totalorder %s15, 1
    %p80 = scmp.ne.s32.totalorder %s75, %s77
    %p81 = scmp.eq.s32.totalorder %s15, 0
    %p82 = por %p80, %p81
    %p83 = scmp.ne.s32.totalorder %s75, %s77
    %p84 = scmp.eq.s32.totalorder %s20, 1
    %p85 = por %p83, %p84
    %p86 = scmp.ne.s32.totalorder %s77, %s78
    %p87 = scmp.eq.s32.totalorder %s20, 0
    %p88 = por %p86, %p87
    %p89 = scmp.ne.s32.totalorder %s77, %s78
    %p90 = scmp.eq.s32.totalorder %s21, 1
    %p91 = por %p89, %p90
    %p93 = scmp.ne.s32.totalorder %s78, %s92
    %p94 = scmp.eq.s32.totalorder %s21, 0
    %p95 = por %p93, %p94
    %s97 = sadd.s32 %s96, 1
    %p100 = scmp.eq.s32.totalorder %s15, 1
    %p101 = scmp.ne.s32.totalorder %s96, %s98
    %p102 = scmp.eq.s32.totalorder %s15, 0
    %p103 = por %p101, %p102
    %p104 = scmp.ne.s32.totalorder %s96, %s98
    %p105 = scmp.eq.s32.totalorder %s20, 1
    %p106 = por %p104, %p105
    %p107 = scmp.ne.s32.totalorder %s98, %s99
    %p108 = scmp.eq.s32.totalorder %s20, 0
    %p109 = por %p107, %p108
    %p110 = scmp.ne.s32.totalorder %s98, %s99
    %p111 = scmp.eq.s32.totalorder %s21, 1
    %p112 = por %p110, %p111
    %p114 = scmp.ne.s32.totalorder %s99, %s113
    %p115 = scmp.eq.s32.totalorder %s21, 0
    %p116 = por %p114, %p115
    %s118 = sadd.s32 %s117, 1
    %p121 = scmp.eq.s32.totalorder %s15, 1
    %p122 = scmp.ne.s32.totalorder %s117, %s119
    %p123 = scmp.eq.s32.totalorder %s15, 0
    %p124 = por %p122, %p123
    %p125 = scmp.ne.s32.totalorder %s117, %s119
    %p126 = scmp.eq.s32.totalorder %s20, 1
    %p127 = por %p125, %p126
    %p128 = scmp.ne.s32.totalorder %s119, %s120
    %p129 = scmp.eq.s32.totalorder %s20, 0
    %p130 = por %p128, %p129
    %p131 = scmp.ne.s32.totalorder %s119, %s120
    %p132 = scmp.eq.s32.totalorder %s21, 1
    %p133 = por %p131, %p132
    %p135 = scmp.ne.s32.totalorder %s120, %s134
    %p136 = scmp.eq.s32.totalorder %s21, 0
    %p137 = por %p135, %p136
    %s139 = sadd.s32 %s138, 1
    %p142 = scmp.eq.s32.totalorder %s15, 1
    %p143 = scmp.ne.s32.totalorder %s138, %s140
    %p144 = scmp.eq.s32.totalorder %s15, 0
    %p145 = por %p143, %p144
    %p146 = scmp.ne.s32.totalorder %s138, %s140
    %p147 = scmp.eq.s32.totalorder %s20, 1
    %p148 = por %p146, %p147
    %p149 = scmp.ne.s32.totalorder %s140, %s141
    %p150 = scmp.eq.s32.totalorder %s20, 0
    %p151 = por %p149, %p150
    %p152 = scmp.ne.s32.totalorder %s140, %s141
    %p153 = scmp.eq.s32.totalorder %s21, 1
    %p154 = por %p152, %p153
    %p156 = scmp.ne.s32.totalorder %s141, %s155
    %p157 = scmp.eq.s32.totalorder %s21, 0
    %p158 = por %p156, %p157
    %s160 = sadd.s32 %s159, 1
    %p163 = scmp.eq.s32.totalorder %s15, 1
    %p164 = scmp.ne.s32.totalorder %s159, %s161
    %p165 = scmp.eq.s32.totalorder %s15, 0
    %p166 = por %p164, %p165
    %p167 = scmp.ne.s32.totalorder %s159, %s161
    %p168 = scmp.eq.s32.totalorder %s20, 1
    %p169 = por %p167, %p168
    %p170 = scmp.ne.s32.totalorder %s161, %s162
    %p171 = scmp.eq.s32.totalorder %s20, 0
    %p172 = por %p170, %p171
    %p173 = scmp.ne.s32.totalorder %s161, %s162
    %p174 = scmp.eq.s32.totalorder %s21, 1
    %p175 = por %p173, %p174
    %p177 = scmp.ne.s32.totalorder %s162, %s176
    %p178 = scmp.eq.s32.totalorder %s21, 0
    %p179 = por %p177, %p178
    %s181 = sadd.s32 %s180, 1
    %p184 = scmp.eq.s32.totalorder %s15, 1
    %p185 = scmp.ne.s32.totalorder %s180, %s182
    %p186 = scmp.eq.s32.totalorder %s15, 0
    %p187 = por %p185, %p186
    %p188 = scmp.ne.s32.totalorder %s180, %s182
    %p189 = scmp.eq.s32.totalorder %s20, 1
    %p190 = por %p188, %p189
    %p191 = scmp.ne.s32.totalorder %s182, %s183
    %p192 = scmp.eq.s32.totalorder %s20, 0
    %p193 = por %p191, %p192
    %p194 = scmp.ne.s32.totalorder %s182, %s183
    %p195 = scmp.eq.s32.totalorder %s21, 1
    %p196 = por %p194, %p195
    %p198 = scmp.ne.s32.totalorder %s183, %s197
    %p199 = scmp.eq.s32.totalorder %s21, 0
    %p200 = por %p198, %p199
    %s202 = sadd.s32 %s201, 1
    %p205 = scmp.eq.s32.totalorder %s15, 1
    %p206 = scmp.ne.s32.totalorder %s201, %s203
    %p207 = scmp.eq.s32.totalorder %s15, 0
    %p208 = por %p206, %p207
    %p209 = scmp.ne.s32.totalorder %s201, %s203
    %p210 = scmp.eq.s32.totalorder %s20, 1
    %p211 = por %p209, %p210
    %p212 = scmp.ne.s32.totalorder %s203, %s204
    %p213 = scmp.eq.s32.totalorder %s20, 0
    %p214 = por %p212, %p213
    %p215 = scmp.ne.s32.totalorder %s203, %s204
    %p216 = scmp.eq.s32.totalorder %s21, 1
    %p217 = por %p215, %p216
    %p219 = scmp.ne.s32.totalorder %s204, %s218
    %p220 = scmp.eq.s32.totalorder %s21, 0
    %p221 = por %p219, %p220
    %s222 = ssub.s32 %s15, %s22
    %p223 = scmp.eq.s32.totalorder %s222, 0
    %s225 = sadd.s32 %s224, 1
    %s226 = scalar_select %p223, %s224, %s225
    %p229 = pneg %p223
    %p230 = scmp.eq.s32.totalorder %s15, 1
    %p231 = por %p229, %p230
    %p232 = scmp.ne.s32.totalorder %s224, %s227
    %p233 = scmp.eq.s32.totalorder %s15, 0
    %p234 = por %p232, %p233
    %p235 = scmp.ne.s32.totalorder %s224, %s227
    %p236 = scmp.eq.s32.totalorder %s20, 1
    %p237 = por %p235, %p236
    %p238 = scmp.ne.s32.totalorder %s227, %s228
    %p239 = scmp.eq.s32.totalorder %s20, 0
    %p240 = por %p238, %p239
    %p241 = scmp.ne.s32.totalorder %s227, %s228
    %p242 = scmp.eq.s32.totalorder %s21, 1
    %p243 = por %p241, %p242
    %p245 = scmp.ne.s32.totalorder %s228, %s244
    %p246 = scmp.eq.s32.totalorder %s21, 0
    %p247 = por %p245, %p246
    %p248 = scmp.le.s32.totalorder 1, %s15
    %p249 = scmp.lt.s32.totalorder %s15, 3
    %p250 = pnand %p248, %p249
    %p251 = pneg %p250
    // Predicated region
    $region9: #{tpu_custom_call.1} parent=5 // pred_check
      _
    $region10: #{tpu_custom_call.1} parent=5 // pred_check_branch
      %253 = sbr.rel (%p250) target = $region12
    $region11: #{tpu_custom_call.1} parent=5 // pred_region
      %s254 = ssub.s32 %s15, 1
      // Predicated region
      $region13: #{tpu_custom_call.1} parent=11 // pred_check
        %p255 = pneg %p88
      $region14: #{tpu_custom_call.1} parent=11 // pred_check_branch
        %257 = sbr.rel (%p255) target = $region16
      $region15: #{tpu_custom_call.1} parent=11 // pred_region
        _
      $region16: #{tpu_custom_call.1} parent=11 // pred_fallthru
        _
      // Predicated region
      $region17: #{tpu_custom_call.1} parent=11 // pred_check
        %p258 = pneg %p109
      $region18: #{tpu_custom_call.1} parent=11 // pred_check_branch
        %260 = sbr.rel (%p258) target = $region20
      $region19: #{tpu_custom_call.1} parent=11 // pred_region
        _
      $region20: #{tpu_custom_call.1} parent=11 // pred_fallthru
        _
      // Predicated region
      $region21: #{tpu_custom_call.1} parent=11 // pred_check
        %p261 = pneg %p130
      $region22: #{tpu_custom_call.1} parent=11 // pred_check_branch
        %263 = sbr.rel (%p261) target = $region24
      $region23: #{tpu_custom_call.1} parent=11 // pred_region
        _
      $region24: #{tpu_custom_call.1} parent=11 // pred_fallthru
        _
      // Predicated region
      $region25: #{tpu_custom_call.1} parent=11 // pred_check
        %p264 = pneg %p151
      $region26: #{tpu_custom_call.1} parent=11 // pred_check_branch
        %266 = sbr.rel (%p264) target = $region28
      $region27: #{tpu_custom_call.1} parent=11 // pred_region
        _
      $region28: #{tpu_custom_call.1} parent=11 // pred_fallthru
        _
      // Predicated region
      $region29: #{tpu_custom_call.1} parent=11 // pred_check
        %p267 = pneg %p172
      $region30: #{tpu_custom_call.1} parent=11 // pred_check_branch
        %269 = sbr.rel (%p267) target = $region32
      $region31: #{tpu_custom_call.1} parent=11 // pred_region
        _
      $region32: #{tpu_custom_call.1} parent=11 // pred_fallthru
        _
      // Predicated region
      $region33: #{tpu_custom_call.1} parent=11 // pred_check
        %p270 = pneg %p193
      $region34: #{tpu_custom_call.1} parent=11 // pred_check_branch
        %272 = sbr.rel (%p270) target = $region36
      $region35: #{tpu_custom_call.1} parent=11 // pred_region
        _
      $region36: #{tpu_custom_call.1} parent=11 // pred_fallthru
        _
      // Predicated region
      $region37: #{tpu_custom_call.1} parent=11 // pred_check
        %p273 = pneg %p214
      $region38: #{tpu_custom_call.1} parent=11 // pred_check_branch
        %275 = sbr.rel (%p273) target = $region40
      $region39: #{tpu_custom_call.1} parent=11 // pred_region
        _
      $region40: #{tpu_custom_call.1} parent=11 // pred_fallthru
        _
    $region12: #{tpu_custom_call.1} parent=5 // pred_fallthru
      _
    %p276 = scmp.lt.s32.totalorder %s15, 2
    // Predicated region
    $region41: #{tpu_custom_call.1} parent=5 // pred_check
      %p277 = pneg %p276
    $region42: #{tpu_custom_call.1} parent=5 // pred_check_branch
      %279 = sbr.rel (%p277) target = $region44
    $region43: #{tpu_custom_call.1} parent=5 // pred_region
      // Predicated region
      $region45: #{tpu_custom_call.1} parent=43 // pred_check
        %p280 = pneg %p35
      $region46: #{tpu_custom_call.1} parent=43 // pred_check_branch
        %282 = sbr.rel (%p280) target = $region48
      $region47: #{tpu_custom_call.1} parent=43 // pred_region
        %s283 = smul.u32 32, %s15
        %p284 = scmp.lt.s32.totalorder %s283, 63
        %s285 = scalar_select %p284, %s283, 63
        %s286 = smul.addr %s285, 8
        %s287 = scalar_lea.vmem %s0, %s286
        %s288 = smul.u32 32, %s15
      $region48: #{tpu_custom_call.1} parent=43 // pred_fallthru
        _
      // Predicated region
      $region49: #{tpu_custom_call.1} parent=43 // pred_check
        %p289 = pneg %p61
      $region50: #{tpu_custom_call.1} parent=43 // pred_check_branch
        %291 = sbr.rel (%p289) target = $region52
      $region51: #{tpu_custom_call.1} parent=43 // pred_region
        %s292 = smul.u32 32, %s15
        %p293 = scmp.lt.s32.totalorder %s292, 63
        %s294 = scalar_select %p293, %s292, 63
        %s295 = smul.addr %s294, 8
        %s296 = scalar_lea.vmem %s1, %s295
        %s297 = smul.u32 32, %s15
      $region52: #{tpu_custom_call.1} parent=43 // pred_fallthru
        _
    $region44: #{tpu_custom_call.1} parent=5 // pred_fallthru
      _
    %p298 = scmp.le.s32.totalorder 1, %s15
    %p299 = scmp.lt.s32.totalorder %s15, 3
    %p300 = pnand %p298, %p299
    %p301 = pneg %p300
    // Predicated region
    $region53: #{tpu_custom_call.1} parent=5 // pred_check
      _
    $region54: #{tpu_custom_call.1} parent=5 // pred_check_branch
      %303 = sbr.rel (%p300) target = $region56
    $region55: #{tpu_custom_call.1} parent=5 // pred_region
      %s304 = ssub.s32 %s15, 1
      %s305 = smul.u32 32, %s20
      %p306 = scmp.lt.s32.totalorder %s305, 63
      %s307 = scalar_select %p306, %s305, 63
      %s308 = smul.addr %s307, 8
      %s309 = scalar_lea.vmem %s0, %s308
      %p310 = pneg %p41
      %p311 = pneg %p38
      %s312 = smul.u32 32, %s20
      %p313 = scmp.lt.s32.totalorder %s312, 63
      %s314 = scalar_select %p313, %s312, 63
      %s315 = smul.addr %s314, 8
      %s316 = scalar_lea.vmem %s1, %s315
      %p317 = pneg %p67
      %p318 = pneg %p64
      %p319 = pneg %p88
      %p320 = pneg %p85
      %p321 = pneg %p109
      %p322 = pneg %p106
      %p323 = pneg %p130
      %p324 = pneg %p127
      %p325 = pneg %p151
      %p326 = pneg %p148
      %p327 = pneg %p172
      %p328 = pneg %p169
      %p329 = pneg %p193
      %p330 = pneg %p190
      %p331 = pneg %p214
      %p332 = pneg %p211
      %p333 = pneg %p240
      %p334 = pneg %p237
      %s335 = smul.u32 32, %s20
      %p336 = scmp.lt.s32.totalorder %s335, 63
      %s337 = scalar_select %p336, %s335, 63
      %s338 = smul.addr %s337, 8
      %s339 = scalar_lea.vmem %s9, %s338
      %s340 = smul.u32 32, %s20
      %p341 = scmp.lt.s32.totalorder %s340, 63
      %s342 = scalar_select %p341, %s340, 63
      %s343 = smul.addr %s342, 8
      %s344 = scalar_lea.vmem %s0, %s343
      %s345 = smul.u32 32, %s20
      %s346 = smul.u32 32, %s20
      %p347 = scmp.lt.s32.totalorder %s346, 63
      %s348 = scalar_select %p347, %s346, 63
      %s349 = smul.addr %s348, 8
      %s350 = scalar_lea.vmem %s1, %s349
      %s351 = smul.u32 32, %s20
      %s352 = smul.u32 32, %s20
      %p353 = scmp.lt.s32.totalorder %s352, 63
      %s354 = scalar_select %p353, %s352, 63
      %s355 = smul.addr %s354, 8
      %s356 = scalar_lea.vmem %s9, %s355
      %s357 = smul.u32 32, %s20
      %v358 = vld [vmem:[%s344] sm:$0xff]
      %v359 = vld [vmem:[%s344 + $0x8] sm:$0xff]
      %v360 = vld [vmem:[%s344 + $0x10] sm:$0xff]
      %v361 = vld [vmem:[%s344 + $0x18] sm:$0xff]
      %v362 = vld [vmem:[%s344 + $0x20] sm:$0xff]
      %v363 = vld [vmem:[%s344 + $0x28] sm:$0xff]
      %v364 = vld [vmem:[%s344 + $0x30] sm:$0xff]
      %v365 = vld [vmem:[%s344 + $0x38] sm:$0xff]
      %v366 = vld [vmem:[%s344 + $0x40] sm:$0xff]
      %v367 = vld [vmem:[%s344 + $0x48] sm:$0xff]
      %v368 = vld [vmem:[%s344 + $0x50] sm:$0xff]
      %v369 = vld [vmem:[%s344 + $0x58] sm:$0xff]
      %v370 = vld [vmem:[%s344 + $0x60] sm:$0xff]
      %v371 = vld [vmem:[%s344 + $0x68] sm:$0xff]
      %v372 = vld [vmem:[%s344 + $0x70] sm:$0xff]
      %v373 = vld [vmem:[%s344 + $0x78] sm:$0xff]
      %v374 = vld [vmem:[%s344 + $0x80] sm:$0xff]
      %v375 = vld [vmem:[%s344 + $0x88] sm:$0xff]
      %v376 = vld [vmem:[%s344 + $0x90] sm:$0xff]
      %v377 = vld [vmem:[%s344 + $0x98] sm:$0xff]
      %v378 = vld [vmem:[%s344 + $0xa0] sm:$0xff]
      %v379 = vld [vmem:[%s344 + $0xa8] sm:$0xff]
      %v380 = vld [vmem:[%s344 + $0xb0] sm:$0xff]
      %v381 = vld [vmem:[%s344 + $0xb8] sm:$0xff]
      %v382 = vld [vmem:[%s344 + $0xc0] sm:$0xff]
      %v383 = vld [vmem:[%s344 + $0xc8] sm:$0xff]
      %v384 = vld [vmem:[%s344 + $0xd0] sm:$0xff]
      %v385 = vld [vmem:[%s344 + $0xd8] sm:$0xff]
      %v386 = vld [vmem:[%s344 + $0xe0] sm:$0xff]
      %v387 = vld [vmem:[%s344 + $0xe8] sm:$0xff]
      %v388 = vld [vmem:[%s344 + $0xf0] sm:$0xff]
      %v389 = vld [vmem:[%s344 + $0xf8] sm:$0xff]
      %v390 = vld [vmem:[%s2] sm:$0xf]
      %v391 = vld [vmem:[%s350] sm:$0xff]
      %v392 = vld [vmem:[%s350 + $0x8] sm:$0xff]
      %v393 = vld [vmem:[%s350 + $0x10] sm:$0xff]
      %v394 = vld [vmem:[%s350 + $0x18] sm:$0xff]
      %v395 = vld [vmem:[%s350 + $0x20] sm:$0xff]
      %v396 = vld [vmem:[%s350 + $0x28] sm:$0xff]
      %v397 = vld [vmem:[%s350 + $0x30] sm:$0xff]
      %v398 = vld [vmem:[%s350 + $0x38] sm:$0xff]
      %v399 = vld [vmem:[%s350 + $0x40] sm:$0xff]
      %v400 = vld [vmem:[%s350 + $0x48] sm:$0xff]
      %v401 = vld [vmem:[%s350 + $0x50] sm:$0xff]
      %v402 = vld [vmem:[%s350 + $0x58] sm:$0xff]
      %v403 = vld [vmem:[%s350 + $0x60] sm:$0xff]
      %v404 = vld [vmem:[%s350 + $0x68] sm:$0xff]
      %v405 = vld [vmem:[%s350 + $0x70] sm:$0xff]
      %v406 = vld [vmem:[%s350 + $0x78] sm:$0xff]
      %v407 = vld [vmem:[%s350 + $0x80] sm:$0xff]
      %v408 = vld [vmem:[%s350 + $0x88] sm:$0xff]
      %v409 = vld [vmem:[%s350 + $0x90] sm:$0xff]
      %v410 = vld [vmem:[%s350 + $0x98] sm:$0xff]
      %v411 = vld [vmem:[%s350 + $0xa0] sm:$0xff]
      %v412 = vld [vmem:[%s350 + $0xa8] sm:$0xff]
      %v413 = vld [vmem:[%s350 + $0xb0] sm:$0xff]
      %v414 = vld [vmem:[%s350 + $0xb8] sm:$0xff]
      %v415 = vld [vmem:[%s350 + $0xc0] sm:$0xff]
      %v416 = vld [vmem:[%s350 + $0xc8] sm:$0xff]
      %v417 = vld [vmem:[%s350 + $0xd0] sm:$0xff]
      %v418 = vld [vmem:[%s350 + $0xd8] sm:$0xff]
      %v419 = vld [vmem:[%s350 + $0xe0] sm:$0xff]
      %v420 = vld [vmem:[%s350 + $0xe8] sm:$0xff]
      %v421 = vld [vmem:[%s350 + $0xf0] sm:$0xff]
      %v422 = vld [vmem:[%s350 + $0xf8] sm:$0xff]
      %v423 = vld [vmem:[%s3] sm:$0xff]
      %v424 = vld [vmem:[%s3 + $0x8] sm:$0xff]
      %v425 = vld [vmem:[%s3 + $0x10] sm:$0xff]
      %v426 = vld [vmem:[%s3 + $0x18] sm:$0xf]
      %vm427 = vcmask 228352
      %v429 = vsel %vm427, %v391, 0
      %v432 = vsel %vm427, %v392, 0
      %v435 = vsel %vm427, %v393, 0
      %v438 = vsel %vm427, %v394, 0
      %v441 = vsel %vm427, %v395, 0
      %v444 = vsel %vm427, %v396, 0
      %v447 = vsel %vm427, %v397, 0
      %v450 = vsel %vm427, %v398, 0
      %v453 = vsel %vm427, %v399, 0
      %v456 = vsel %vm427, %v400, 0
      %v459 = vsel %vm427, %v401, 0
      %v462 = vsel %vm427, %v402, 0
      %v465 = vsel %vm427, %v403, 0
      %v468 = vsel %vm427, %v404, 0
      %v471 = vsel %vm427, %v405, 0
      %v474 = vsel %vm427, %v406, 0
      %v477 = vsel %vm427, %v407, 0
      %v480 = vsel %vm427, %v408, 0
      %v483 = vsel %vm427, %v409, 0
      %v486 = vsel %vm427, %v410, 0
      %v489 = vsel %vm427, %v411, 0
      %v492 = vsel %vm427, %v412, 0
      %v495 = vsel %vm427, %v413, 0
      %v498 = vsel %vm427, %v414, 0
      %v501 = vsel %vm427, %v415, 0
      %v504 = vsel %vm427, %v416, 0
      %v507 = vsel %vm427, %v417, 0
      %v510 = vsel %vm427, %v418, 0
      %v513 = vsel %vm427, %v419, 0
      %v516 = vsel %vm427, %v420, 0
      %v519 = vsel %vm427, %v421, 0
      %v522 = vsel %vm427, %v422, 0
      %vm524 = vcmask 1043456
      %v526 = vsel %vm524, %v426, 0
      %528 = vmatpush.msra.mxu0 0.0
      %529 = vmatpush.msra.mxu0 0.0
      %530 = vmatpush.msra.mxu0 0.0
      %531 = vmatpush.msra.mxu0 0.0
      %532 = vmatpush.msra.mxu0 0.0
      %533 = vmatpush.msra.mxu0 0.0
      %534 = vmatpush.msra.mxu0 0.0
      %535 = vmatpush.msra.mxu0 0.0
      %536 = vmatpush.msra.mxu0 0.0
      %537 = vmatpush.msra.mxu0 0.0
      %538 = vmatpush.msra.mxu0 0.0
      %539 = vmatpush.msra.mxu0 0.0
      %540 = vmatpush.msra.mxu0 %v526
      %541 = vmatpush.msra.mxu0 %v425
      %542 = vmatpush.msra.mxu0 %v424
      %543 = vmatpush.msra.mxu0 %v423
      %544 = vmatmul.f32.gmra.mxu0 %v429
      %v545 = vpop.f32.mrf.mxu0
      %v546 = vadd.f32 0.0, %v545
      %547 = vmatmul.f32.gmra.mxu0 %v432
      %v548 = vpop.f32.mrf.mxu0
      %v549 = vadd.f32 0.0, %v548
      %550 = vmatmul.f32.gmra.mxu0 %v435
      %v551 = vpop.f32.mrf.mxu0
      %v552 = vadd.f32 0.0, %v551
      %553 = vmatmul.f32.gmra.mxu0 %v438
      %v554 = vpop.f32.mrf.mxu0
      %v555 = vadd.f32 0.0, %v554
      %556 = vmatmul.f32.gmra.mxu0 %v441
      %v557 = vpop.f32.mrf.mxu0
      %v558 = vadd.f32 0.0, %v557
      %559 = vmatmul.f32.gmra.mxu0 %v444
      %v560 = vpop.f32.mrf.mxu0
      %v561 = vadd.f32 0.0, %v560
      %562 = vmatmul.f32.gmra.mxu0 %v447
      %v563 = vpop.f32.mrf.mxu0
      %v564 = vadd.f32 0.0, %v563
      %565 = vmatmul.f32.gmra.mxu0 %v450
      %v566 = vpop.f32.mrf.mxu0
      %v567 = vadd.f32 0.0, %v566
      %568 = vmatmul.f32.gmra.mxu0 %v453
      %v569 = vpop.f32.mrf.mxu0
      %v570 = vadd.f32 0.0, %v569
      %571 = vmatmul.f32.gmra.mxu0 %v456
      %v572 = vpop.f32.mrf.mxu0
      %v573 = vadd.f32 0.0, %v572
      %574 = vmatmul.f32.gmra.mxu0 %v459
      %v575 = vpop.f32.mrf.mxu0
      %v576 = vadd.f32 0.0, %v575
      %577 = vmatmul.f32.gmra.mxu0 %v462
      %v578 = vpop.f32.mrf.mxu0
      %v579 = vadd.f32 0.0, %v578
      %580 = vmatmul.f32.gmra.mxu0 %v465
      %v581 = vpop.f32.mrf.mxu0
      %v582 = vadd.f32 0.0, %v581
      %583 = vmatmul.f32.gmra.mxu0 %v468
      %v584 = vpop.f32.mrf.mxu0
      %v585 = vadd.f32 0.0, %v584
      %586 = vmatmul.f32.gmra.mxu0 %v471
      %v587 = vpop.f32.mrf.mxu0
      %v588 = vadd.f32 0.0, %v587
      %589 = vmatmul.f32.gmra.mxu0 %v474
      %v590 = vpop.f32.mrf.mxu0
      %v591 = vadd.f32 0.0, %v590
      %592 = vmatmul.f32.gmra.mxu0 %v477
      %v593 = vpop.f32.mrf.mxu0
      %v594 = vadd.f32 0.0, %v593
      %595 = vmatmul.f32.gmra.mxu0 %v480
      %v596 = vpop.f32.mrf.mxu0
      %v597 = vadd.f32 0.0, %v596
      %598 = vmatmul.f32.gmra.mxu0 %v483
      %v599 = vpop.f32.mrf.mxu0
      %v600 = vadd.f32 0.0, %v599
      %601 = vmatmul.f32.gmra.mxu0 %v486
      %v602 = vpop.f32.mrf.mxu0
      %v603 = vadd.f32 0.0, %v602
      %604 = vmatmul.f32.gmra.mxu0 %v489
      %v605 = vpop.f32.mrf.mxu0
      %v606 = vadd.f32 0.0, %v605
      %607 = vmatmul.f32.gmra.mxu0 %v492
      %v608 = vpop.f32.mrf.mxu0
      %v609 = vadd.f32 0.0, %v608
      %610 = vmatmul.f32.gmra.mxu0 %v495
      %v611 = vpop.f32.mrf.mxu0
      %v612 = vadd.f32 0.0, %v611
      %613 = vmatmul.f32.gmra.mxu0 %v498
      %v614 = vpop.f32.mrf.mxu0
      %v615 = vadd.f32 0.0, %v614
      %616 = vmatmul.f32.gmra.mxu0 %v501
      %v617 = vpop.f32.mrf.mxu0
      %v618 = vadd.f32 0.0, %v617
      %619 = vmatmul.f32.gmra.mxu0 %v504
      %v620 = vpop.f32.mrf.mxu0
      %v621 = vadd.f32 0.0, %v620
      %622 = vmatmul.f32.gmra.mxu0 %v507
      %v623 = vpop.f32.mrf.mxu0
      %v624 = vadd.f32 0.0, %v623
      %625 = vmatmul.f32.gmra.mxu0 %v510
      %v626 = vpop.f32.mrf.mxu0
      %v627 = vadd.f32 0.0, %v626
      %628 = vmatmul.f32.gmra.mxu0 %v513
      %v629 = vpop.f32.mrf.mxu0
      %v630 = vadd.f32 0.0, %v629
      %631 = vmatmul.f32.gmra.mxu0 %v516
      %v632 = vpop.f32.mrf.mxu0
      %v633 = vadd.f32 0.0, %v632
      %634 = vmatmul.f32.gmra.mxu0 %v519
      %v635 = vpop.f32.mrf.mxu0
      %v636 = vadd.f32 0.0, %v635
      %637 = vmatmul.f32.gmra.mxu0 %v522
      %v638 = vpop.f32.mrf.mxu0
      %v639 = vadd.f32 0.0, %v638
      %640 = vdwg.mxu0
      %vm641 = vcmask 31744
      %v643 = vsel %vm641, %v358, 0
      %v646 = vsel %vm641, %v359, 0
      %v649 = vsel %vm641, %v360, 0
      %v652 = vsel %vm641, %v361, 0
      %v655 = vsel %vm641, %v362, 0
      %v658 = vsel %vm641, %v363, 0
      %v661 = vsel %vm641, %v364, 0
      %v664 = vsel %vm641, %v365, 0
      %v667 = vsel %vm641, %v366, 0
      %v670 = vsel %vm641, %v367, 0
      %v673 = vsel %vm641, %v368, 0
      %v676 = vsel %vm641, %v369, 0
      %v679 = vsel %vm641, %v370, 0
      %v682 = vsel %vm641, %v371, 0
      %v685 = vsel %vm641, %v372, 0
      %v688 = vsel %vm641, %v373, 0
      %v691 = vsel %vm641, %v374, 0
      %v694 = vsel %vm641, %v375, 0
      %v697 = vsel %vm641, %v376, 0
      %v700 = vsel %vm641, %v377, 0
      %v703 = vsel %vm641, %v378, 0
      %v706 = vsel %vm641, %v379, 0
      %v709 = vsel %vm641, %v380, 0
      %v712 = vsel %vm641, %v381, 0
      %v715 = vsel %vm641, %v382, 0
      %v718 = vsel %vm641, %v383, 0
      %v721 = vsel %vm641, %v384, 0
      %v724 = vsel %vm641, %v385, 0
      %v727 = vsel %vm641, %v386, 0
      %v730 = vsel %vm641, %v387, 0
      %v733 = vsel %vm641, %v388, 0
      %v736 = vsel %vm641, %v389, 0
      %v739 = vsel %vm524, %v390, 0
      %741 = vmatpush.msra.mxu0 0.0
      %742 = vmatpush.msra.mxu0 0.0
      %743 = vmatpush.msra.mxu0 0.0
      %744 = vmatpush.msra.mxu0 0.0
      %745 = vmatpush.msra.mxu0 0.0
      %746 = vmatpush.msra.mxu0 0.0
      %747 = vmatpush.msra.mxu0 0.0
      %748 = vmatpush.msra.mxu0 0.0
      %749 = vmatpush.msra.mxu0 0.0
      %750 = vmatpush.msra.mxu0 0.0
      %751 = vmatpush.msra.mxu0 0.0
      %752 = vmatpush.msra.mxu0 0.0
      %753 = vmatpush.msra.mxu0 0.0
      %754 = vmatpush.msra.mxu0 0.0
      %755 = vmatpush.msra.mxu0 0.0
      %756 = vmatpush.msra.mxu0 %v739
      %757 = vmatmul.f32.gmra.mxu0 %v643
      %v758 = vpop.f32.mrf.mxu0
      %v759 = vadd.f32 %v546, %v758
      %760 = vmatmul.f32.gmra.mxu0 %v646
      %v761 = vpop.f32.mrf.mxu0
      %v762 = vadd.f32 %v549, %v761
      %763 = vmatmul.f32.gmra.mxu0 %v649
      %v764 = vpop.f32.mrf.mxu0
      %v765 = vadd.f32 %v552, %v764
      %766 = vmatmul.f32.gmra.mxu0 %v652
      %v767 = vpop.f32.mrf.mxu0
      %v768 = vadd.f32 %v555, %v767
      %769 = vmatmul.f32.gmra.mxu0 %v655
      %v770 = vpop.f32.mrf.mxu0
      %v771 = vadd.f32 %v558, %v770
      %772 = vmatmul.f32.gmra.mxu0 %v658
      %v773 = vpop.f32.mrf.mxu0
      %v774 = vadd.f32 %v561, %v773
      %775 = vmatmul.f32.gmra.mxu0 %v661
      %v776 = vpop.f32.mrf.mxu0
      %v777 = vadd.f32 %v564, %v776
      %778 = vmatmul.f32.gmra.mxu0 %v664
      %v779 = vpop.f32.mrf.mxu0
      %v780 = vadd.f32 %v567, %v779
      %781 = vmatmul.f32.gmra.mxu0 %v667
      %v782 = vpop.f32.mrf.mxu0
      %v783 = vadd.f32 %v570, %v782
      %784 = vmatmul.f32.gmra.mxu0 %v670
      %v785 = vpop.f32.mrf.mxu0
      %v786 = vadd.f32 %v573, %v785
      %787 = vmatmul.f32.gmra.mxu0 %v673
      %v788 = vpop.f32.mrf.mxu0
      %v789 = vadd.f32 %v576, %v788
      %790 = vmatmul.f32.gmra.mxu0 %v676
      %v791 = vpop.f32.mrf.mxu0
      %v792 = vadd.f32 %v579, %v791
      %793 = vmatmul.f32.gmra.mxu0 %v679
      %v794 = vpop.f32.mrf.mxu0
      %v795 = vadd.f32 %v582, %v794
      %796 = vmatmul.f32.gmra.mxu0 %v682
      %v797 = vpop.f32.mrf.mxu0
      %v798 = vadd.f32 %v585, %v797
      %799 = vmatmul.f32.gmra.mxu0 %v685
      %v800 = vpop.f32.mrf.mxu0
      %v801 = vadd.f32 %v588, %v800
      %802 = vmatmul.f32.gmra.mxu0 %v688
      %v803 = vpop.f32.mrf.mxu0
      %v804 = vadd.f32 %v591, %v803
      %805 = vmatmul.f32.gmra.mxu0 %v691
      %v806 = vpop.f32.mrf.mxu0
      %v807 = vadd.f32 %v594, %v806
      %808 = vmatmul.f32.gmra.mxu0 %v694
      %v809 = vpop.f32.mrf.mxu0
      %v810 = vadd.f32 %v597, %v809
      %811 = vmatmul.f32.gmra.mxu0 %v697
      %v812 = vpop.f32.mrf.mxu0
      %v813 = vadd.f32 %v600, %v812
      %814 = vmatmul.f32.gmra.mxu0 %v700
      %v815 = vpop.f32.mrf.mxu0
      %v816 = vadd.f32 %v603, %v815
      %817 = vmatmul.f32.gmra.mxu0 %v703
      %v818 = vpop.f32.mrf.mxu0
      %v819 = vadd.f32 %v606, %v818
      %820 = vmatmul.f32.gmra.mxu0 %v706
      %v821 = vpop.f32.mrf.mxu0
      %v822 = vadd.f32 %v609, %v821
      %823 = vmatmul.f32.gmra.mxu0 %v709
      %v824 = vpop.f32.mrf.mxu0
      %v825 = vadd.f32 %v612, %v824
      %826 = vmatmul.f32.gmra.mxu0 %v712
      %v827 = vpop.f32.mrf.mxu0
      %v828 = vadd.f32 %v615, %v827
      %829 = vmatmul.f32.gmra.mxu0 %v715
      %v830 = vpop.f32.mrf.mxu0
      %v831 = vadd.f32 %v618, %v830
      %832 = vmatmul.f32.gmra.mxu0 %v718
      %v833 = vpop.f32.mrf.mxu0
      %v834 = vadd.f32 %v621, %v833
      %835 = vmatmul.f32.gmra.mxu0 %v721
      %v836 = vpop.f32.mrf.mxu0
      %v837 = vadd.f32 %v624, %v836
      %838 = vmatmul.f32.gmra.mxu0 %v724
      %v839 = vpop.f32.mrf.mxu0
      %v840 = vadd.f32 %v627, %v839
      %841 = vmatmul.f32.gmra.mxu0 %v727
      %v842 = vpop.f32.mrf.mxu0
      %v843 = vadd.f32 %v630, %v842
      %844 = vmatmul.f32.gmra.mxu0 %v730
      %v845 = vpop.f32.mrf.mxu0
      %v846 = vadd.f32 %v633, %v845
      %847 = vmatmul.f32.gmra.mxu0 %v733
      %v848 = vpop.f32.mrf.mxu0
      %v849 = vadd.f32 %v636, %v848
      %850 = vmatmul.f32.gmra.mxu0 %v736
      %v851 = vpop.f32.mrf.mxu0
      %v852 = vadd.f32 %v639, %v851
      %853 = vdwg.mxu0
      %v854 = vld [vmem:[%s4] sm:$0x1]
      %v856 = vperm.slane %v854, 0
      %v858 = vadd.f32 %v759, %v856
      %v859 = vadd.f32 %v762, %v856
      %v860 = vadd.f32 %v765, %v856
      %v861 = vadd.f32 %v768, %v856
      %v862 = vadd.f32 %v771, %v856
      %v863 = vadd.f32 %v774, %v856
      %v864 = vadd.f32 %v777, %v856
      %v865 = vadd.f32 %v780, %v856
      %v866 = vadd.f32 %v783, %v856
      %v867 = vadd.f32 %v786, %v856
      %v868 = vadd.f32 %v789, %v856
      %v869 = vadd.f32 %v792, %v856
      %v870 = vadd.f32 %v795, %v856
      %v871 = vadd.f32 %v798, %v856
      %v872 = vadd.f32 %v801, %v856
      %v873 = vadd.f32 %v804, %v856
      %v874 = vadd.f32 %v807, %v856
      %v875 = vadd.f32 %v810, %v856
      %v876 = vadd.f32 %v813, %v856
      %v877 = vadd.f32 %v816, %v856
      %v878 = vadd.f32 %v819, %v856
      %v879 = vadd.f32 %v822, %v856
      %v880 = vadd.f32 %v825, %v856
      %v881 = vadd.f32 %v828, %v856
      %v882 = vadd.f32 %v831, %v856
      %v883 = vadd.f32 %v834, %v856
      %v884 = vadd.f32 %v837, %v856
      %v885 = vadd.f32 %v840, %v856
      %v886 = vadd.f32 %v843, %v856
      %v887 = vadd.f32 %v846, %v856
      %v888 = vadd.f32 %v849, %v856
      %v889 = vadd.f32 %v852, %v856
      %v890 = vxor.u32 %v858, 2147483648
      %v891 = vxor.u32 %v859, 2147483648
      %v892 = vxor.u32 %v860, 2147483648
      %v893 = vxor.u32 %v861, 2147483648
      %v894 = vxor.u32 %v862, 2147483648
      %v895 = vxor.u32 %v863, 2147483648
      %v896 = vxor.u32 %v864, 2147483648
      %v897 = vxor.u32 %v865, 2147483648
      %v898 = vxor.u32 %v866, 2147483648
      %v899 = vxor.u32 %v867, 2147483648
      %v900 = vxor.u32 %v868, 2147483648
      %v901 = vxor.u32 %v869, 2147483648
      %v902 = vxor.u32 %v870, 2147483648
      %v903 = vxor.u32 %v871, 2147483648
      %v904 = vxor.u32 %v872, 2147483648
      %v905 = vxor.u32 %v873, 2147483648
      %v906 = vxor.u32 %v874, 2147483648
      %v907 = vxor.u32 %v875, 2147483648
      %v908 = vxor.u32 %v876, 2147483648
      %v909 = vxor.u32 %v877, 2147483648
      %v910 = vxor.u32 %v878, 2147483648
      %v911 = vxor.u32 %v879, 2147483648
      %v912 = vxor.u32 %v880, 2147483648
      %v913 = vxor.u32 %v881, 2147483648
      %v914 = vxor.u32 %v882, 2147483648
      %v915 = vxor.u32 %v883, 2147483648
      %v916 = vxor.u32 %v884, 2147483648
      %v917 = vxor.u32 %v885, 2147483648
      %v918 = vxor.u32 %v886, 2147483648
      %v919 = vxor.u32 %v887, 2147483648
      %v920 = vxor.u32 %v888, 2147483648
      %v921 = vxor.u32 %v889, 2147483648
      %v922 = vmul.f32 %v890, 1.442695
      %v923 = vpow.pop %v922
      %v924 = vmul.f32 %v891, 1.442695
      %v925 = vpow.pop %v924
      %v926 = vmul.f32 %v892, 1.442695
      %v927 = vpow.pop %v926
      %v928 = vmul.f32 %v893, 1.442695
      %v929 = vpow.pop %v928
      %v930 = vmul.f32 %v894, 1.442695
      %v931 = vpow.pop %v930
      %v932 = vmul.f32 %v895, 1.442695
      %v933 = vpow.pop %v932
      %v934 = vmul.f32 %v896, 1.442695
      %v935 = vpow.pop %v934
      %v936 = vmul.f32 %v897, 1.442695
      %v937 = vpow.pop %v936
      %v938 = vmul.f32 %v898, 1.442695
      %v939 = vpow.pop %v938
      %v940 = vmul.f32 %v899, 1.442695
      %v941 = vpow.pop %v940
      %v942 = vmul.f32 %v900, 1.442695
      %v943 = vpow.pop %v942
      %v944 = vmul.f32 %v901, 1.442695
      %v945 = vpow.pop %v944
      %v946 = vmul.f32 %v902, 1.442695
      %v947 = vpow.pop %v946
      %v948 = vmul.f32 %v903, 1.442695
      %v949 = vpow.pop %v948
      %v950 = vmul.f32 %v904, 1.442695
      %v951 = vpow.pop %v950
      %v952 = vmul.f32 %v905, 1.442695
      %v953 = vpow.pop %v952
      %v954 = vmul.f32 %v906, 1.442695
      %v955 = vpow.pop %v954
      %v956 = vmul.f32 %v907, 1.442695
      %v957 = vpow.pop %v956
      %v958 = vmul.f32 %v908, 1.442695
      %v959 = vpow.pop %v958
      %v960 = vmul.f32 %v909, 1.442695
      %v961 = vpow.pop %v960
      %v962 = vmul.f32 %v910, 1.442695
      %v963 = vpow.pop %v962
      %v964 = vmul.f32 %v911, 1.442695
      %v965 = vpow.pop %v964
      %v966 = vmul.f32 %v912, 1.442695
      %v967 = vpow.pop %v966
      %v968 = vmul.f32 %v913, 1.442695
      %v969 = vpow.pop %v968
      %v970 = vmul.f32 %v914, 1.442695
      %v971 = vpow.pop %v970
      %v972 = vmul.f32 %v915, 1.442695
      %v973 = vpow.pop %v972
      %v974 = vmul.f32 %v916, 1.442695
      %v975 = vpow.pop %v974
      %v976 = vmul.f32 %v917, 1.442695
      %v977 = vpow.pop %v976
      %v978 = vmul.f32 %v918, 1.442695
      %v979 = vpow.pop %v978
      %v980 = vmul.f32 %v919, 1.442695
      %v981 = vpow.pop %v980
      %v982 = vmul.f32 %v920, 1.442695
      %v983 = vpow.pop %v982
      %v984 = vmul.f32 %v921, 1.442695
      %v985 = vpow.pop %v984
      %v986 = vadd.f32 %v923, 1.0
      %v987 = vadd.f32 %v925, 1.0
      %v988 = vadd.f32 %v927, 1.0
      %v989 = vadd.f32 %v929, 1.0
      %v990 = vadd.f32 %v931, 1.0
      %v991 = vadd.f32 %v933, 1.0
      %v992 = vadd.f32 %v935, 1.0
      %v993 = vadd.f32 %v937, 1.0
      %v994 = vadd.f32 %v939, 1.0
      %v995 = vadd.f32 %v941, 1.0
      %v996 = vadd.f32 %v943, 1.0
      %v997 = vadd.f32 %v945, 1.0
      %v998 = vadd.f32 %v947, 1.0
      %v999 = vadd.f32 %v949, 1.0
      %v1000 = vadd.f32 %v951, 1.0
      %v1001 = vadd.f32 %v953, 1.0
      %v1002 = vadd.f32 %v955, 1.0
      %v1003 = vadd.f32 %v957, 1.0
      %v1004 = vadd.f32 %v959, 1.0
      %v1005 = vadd.f32 %v961, 1.0
      %v1006 = vadd.f32 %v963, 1.0
      %v1007 = vadd.f32 %v965, 1.0
      %v1008 = vadd.f32 %v967, 1.0
      %v1009 = vadd.f32 %v969, 1.0
      %v1010 = vadd.f32 %v971, 1.0
      %v1011 = vadd.f32 %v973, 1.0
      %v1012 = vadd.f32 %v975, 1.0
      %v1013 = vadd.f32 %v977, 1.0
      %v1014 = vadd.f32 %v979, 1.0
      %v1015 = vadd.f32 %v981, 1.0
      %v1016 = vadd.f32 %v983, 1.0
      %v1017 = vadd.f32 %v985, 1.0
      %v1018 = vrcp.pop %v986
      %v1019 = vmul.f32 %v986, %v1018
      %v1020 = vsub.f32 1.0, %v1019
      %v1021 = vmul.f32 %v1018, %v1020
      %v1022 = vadd.f32 %v1018, %v1021
      %vm1023 = vweird.f32 %v986
      %vm1024 = vweird.f32 %v1018
      %vm1025 = vmor %vm1023, %vm1024
      %v1026 = vsel %vm1025, %v1018, %v1022
      %v1027 = vand.u32 2147483647, %v986
      %vm1028 = vcmp.eq.f32.partialorder %v1027, 8.507059e+37
      %v1029 = vand.u32 %v986, 2147483648
      %v1030 = vor.u32 1.1754944e-38, %v1029
      %v1031 = vsel %vm1028, %v1030, %v1026
      %v1032 = vmul.f32 1.0, %v1031
      %v1033 = vrcp.pop %v987
      %v1034 = vmul.f32 %v987, %v1033
      %v1035 = vsub.f32 1.0, %v1034
      %v1036 = vmul.f32 %v1033, %v1035
      %v1037 = vadd.f32 %v1033, %v1036
      %vm1038 = vweird.f32 %v987
      %vm1039 = vweird.f32 %v1033
      %vm1040 = vmor %vm1038, %vm1039
      %v1041 = vsel %vm1040, %v1033, %v1037
      %v1042 = vand.u32 2147483647, %v987
      %vm1043 = vcmp.eq.f32.partialorder %v1042, 8.507059e+37
      %v1044 = vand.u32 %v987, 2147483648
      %v1045 = vor.u32 1.1754944e-38, %v1044
      %v1046 = vsel %vm1043, %v1045, %v1041
      %v1047 = vmul.f32 1.0, %v1046
      %v1048 = vrcp.pop %v988
      %v1049 = vmul.f32 %v988, %v1048
      %v1050 = vsub.f32 1.0, %v1049
      %v1051 = vmul.f32 %v1048, %v1050
      %v1052 = vadd.f32 %v1048, %v1051
      %vm1053 = vweird.f32 %v988
      %vm1054 = vweird.f32 %v1048
      %vm1055 = vmor %vm1053, %vm1054
      %v1056 = vsel %vm1055, %v1048, %v1052
      %v1057 = vand.u32 2147483647, %v988
      %vm1058 = vcmp.eq.f32.partialorder %v1057, 8.507059e+37
      %v1059 = vand.u32 %v988, 2147483648
      %v1060 = vor.u32 1.1754944e-38, %v1059
      %v1061 = vsel %vm1058, %v1060, %v1056
      %v1062 = vmul.f32 1.0, %v1061
      %v1063 = vrcp.pop %v989
      %v1064 = vmul.f32 %v989, %v1063
      %v1065 = vsub.f32 1.0, %v1064
      %v1066 = vmul.f32 %v1063, %v1065
      %v1067 = vadd.f32 %v1063, %v1066
      %vm1068 = vweird.f32 %v989
      %vm1069 = vweird.f32 %v1063
      %vm1070 = vmor %vm1068, %vm1069
      %v1071 = vsel %vm1070, %v1063, %v1067
      %v1072 = vand.u32 2147483647, %v989
      %vm1073 = vcmp.eq.f32.partialorder %v1072, 8.507059e+37
      %v1074 = vand.u32 %v989, 2147483648
      %v1075 = vor.u32 1.1754944e-38, %v1074
      %v1076 = vsel %vm1073, %v1075, %v1071
      %v1077 = vmul.f32 1.0, %v1076
      %v1078 = vrcp.pop %v990
      %v1079 = vmul.f32 %v990, %v1078
      %v1080 = vsub.f32 1.0, %v1079
      %v1081 = vmul.f32 %v1078, %v1080
      %v1082 = vadd.f32 %v1078, %v1081
      %vm1083 = vweird.f32 %v990
      %vm1084 = vweird.f32 %v1078
      %vm1085 = vmor %vm1083, %vm1084
      %v1086 = vsel %vm1085, %v1078, %v1082
      %v1087 = vand.u32 2147483647, %v990
      %vm1088 = vcmp.eq.f32.partialorder %v1087, 8.507059e+37
      %v1089 = vand.u32 %v990, 2147483648
      %v1090 = vor.u32 1.1754944e-38, %v1089
      %v1091 = vsel %vm1088, %v1090, %v1086
      %v1092 = vmul.f32 1.0, %v1091
      %v1093 = vrcp.pop %v991
      %v1094 = vmul.f32 %v991, %v1093
      %v1095 = vsub.f32 1.0, %v1094
      %v1096 = vmul.f32 %v1093, %v1095
      %v1097 = vadd.f32 %v1093, %v1096
      %vm1098 = vweird.f32 %v991
      %vm1099 = vweird.f32 %v1093
      %vm1100 = vmor %vm1098, %vm1099
      %v1101 = vsel %vm1100, %v1093, %v1097
      %v1102 = vand.u32 2147483647, %v991
      %vm1103 = vcmp.eq.f32.partialorder %v1102, 8.507059e+37
      %v1104 = vand.u32 %v991, 2147483648
      %v1105 = vor.u32 1.1754944e-38, %v1104
      %v1106 = vsel %vm1103, %v1105, %v1101
      %v1107 = vmul.f32 1.0, %v1106
      %v1108 = vrcp.pop %v992
      %v1109 = vmul.f32 %v992, %v1108
      %v1110 = vsub.f32 1.0, %v1109
      %v1111 = vmul.f32 %v1108, %v1110
      %v1112 = vadd.f32 %v1108, %v1111
      %vm1113 = vweird.f32 %v992
      %vm1114 = vweird.f32 %v1108
      %vm1115 = vmor %vm1113, %vm1114
      %v1116 = vsel %vm1115, %v1108, %v1112
      %v1117 = vand.u32 2147483647, %v992
      %vm1118 = vcmp.eq.f32.partialorder %v1117, 8.507059e+37
      %v1119 = vand.u32 %v992, 2147483648
      %v1120 = vor.u32 1.1754944e-38, %v1119
      %v1121 = vsel %vm1118, %v1120, %v1116
      %v1122 = vmul.f32 1.0, %v1121
      %v1123 = vrcp.pop %v993
      %v1124 = vmul.f32 %v993, %v1123
      %v1125 = vsub.f32 1.0, %v1124
      %v1126 = vmul.f32 %v1123, %v1125
      %v1127 = vadd.f32 %v1123, %v1126
      %vm1128 = vweird.f32 %v993
      %vm1129 = vweird.f32 %v1123
      %vm1130 = vmor %vm1128, %vm1129
      %v1131 = vsel %vm1130, %v1123, %v1127
      %v1132 = vand.u32 2147483647, %v993
      %vm1133 = vcmp.eq.f32.partialorder %v1132, 8.507059e+37
      %v1134 = vand.u32 %v993, 2147483648
      %v1135 = vor.u32 1.1754944e-38, %v1134
      %v1136 = vsel %vm1133, %v1135, %v1131
      %v1137 = vmul.f32 1.0, %v1136
      %v1138 = vrcp.pop %v994
      %v1139 = vmul.f32 %v994, %v1138
      %v1140 = vsub.f32 1.0, %v1139
      %v1141 = vmul.f32 %v1138, %v1140
      %v1142 = vadd.f32 %v1138, %v1141
      %vm1143 = vweird.f32 %v994
      %vm1144 = vweird.f32 %v1138
      %vm1145 = vmor %vm1143, %vm1144
      %v1146 = vsel %vm1145, %v1138, %v1142
      %v1147 = vand.u32 2147483647, %v994
      %vm1148 = vcmp.eq.f32.partialorder %v1147, 8.507059e+37
      %v1149 = vand.u32 %v994, 2147483648
      %v1150 = vor.u32 1.1754944e-38, %v1149
      %v1151 = vsel %vm1148, %v1150, %v1146
      %v1152 = vmul.f32 1.0, %v1151
      %v1153 = vrcp.pop %v995
      %v1154 = vmul.f32 %v995, %v1153
      %v1155 = vsub.f32 1.0, %v1154
      %v1156 = vmul.f32 %v1153, %v1155
      %v1157 = vadd.f32 %v1153, %v1156
      %vm1158 = vweird.f32 %v995
      %vm1159 = vweird.f32 %v1153
      %vm1160 = vmor %vm1158, %vm1159
      %v1161 = vsel %vm1160, %v1153, %v1157
      %v1162 = vand.u32 2147483647, %v995
      %vm1163 = vcmp.eq.f32.partialorder %v1162, 8.507059e+37
      %v1164 = vand.u32 %v995, 2147483648
      %v1165 = vor.u32 1.1754944e-38, %v1164
      %v1166 = vsel %vm1163, %v1165, %v1161
      %v1167 = vmul.f32 1.0, %v1166
      %v1168 = vrcp.pop %v996
      %v1169 = vmul.f32 %v996, %v1168
      %v1170 = vsub.f32 1.0, %v1169
      %v1171 = vmul.f32 %v1168, %v1170
      %v1172 = vadd.f32 %v1168, %v1171
      %vm1173 = vweird.f32 %v996
      %vm1174 = vweird.f32 %v1168
      %vm1175 = vmor %vm1173, %vm1174
      %v1176 = vsel %vm1175, %v1168, %v1172
      %v1177 = vand.u32 2147483647, %v996
      %vm1178 = vcmp.eq.f32.partialorder %v1177, 8.507059e+37
      %v1179 = vand.u32 %v996, 2147483648
      %v1180 = vor.u32 1.1754944e-38, %v1179
      %v1181 = vsel %vm1178, %v1180, %v1176
      %v1182 = vmul.f32 1.0, %v1181
      %v1183 = vrcp.pop %v997
      %v1184 = vmul.f32 %v997, %v1183
      %v1185 = vsub.f32 1.0, %v1184
      %v1186 = vmul.f32 %v1183, %v1185
      %v1187 = vadd.f32 %v1183, %v1186
      %vm1188 = vweird.f32 %v997
      %vm1189 = vweird.f32 %v1183
      %vm1190 = vmor %vm1188, %vm1189
      %v1191 = vsel %vm1190, %v1183, %v1187
      %v1192 = vand.u32 2147483647, %v997
      %vm1193 = vcmp.eq.f32.partialorder %v1192, 8.507059e+37
      %v1194 = vand.u32 %v997, 2147483648
      %v1195 = vor.u32 1.1754944e-38, %v1194
      %v1196 = vsel %vm1193, %v1195, %v1191
      %v1197 = vmul.f32 1.0, %v1196
      %v1198 = vrcp.pop %v998
      %v1199 = vmul.f32 %v998, %v1198
      %v1200 = vsub.f32 1.0, %v1199
      %v1201 = vmul.f32 %v1198, %v1200
      %v1202 = vadd.f32 %v1198, %v1201
      %vm1203 = vweird.f32 %v998
      %vm1204 = vweird.f32 %v1198
      %vm1205 = vmor %vm1203, %vm1204
      %v1206 = vsel %vm1205, %v1198, %v1202
      %v1207 = vand.u32 2147483647, %v998
      %vm1208 = vcmp.eq.f32.partialorder %v1207, 8.507059e+37
      %v1209 = vand.u32 %v998, 2147483648
      %v1210 = vor.u32 1.1754944e-38, %v1209
      %v1211 = vsel %vm1208, %v1210, %v1206
      %v1212 = vmul.f32 1.0, %v1211
      %v1213 = vrcp.pop %v999
      %v1214 = vmul.f32 %v999, %v1213
      %v1215 = vsub.f32 1.0, %v1214
      %v1216 = vmul.f32 %v1213, %v1215
      %v1217 = vadd.f32 %v1213, %v1216
      %vm1218 = vweird.f32 %v999
      %vm1219 = vweird.f32 %v1213
      %vm1220 = vmor %vm1218, %vm1219
      %v1221 = vsel %vm1220, %v1213, %v1217
      %v1222 = vand.u32 2147483647, %v999
      %vm1223 = vcmp.eq.f32.partialorder %v1222, 8.507059e+37
      %v1224 = vand.u32 %v999, 2147483648
      %v1225 = vor.u32 1.1754944e-38, %v1224
      %v1226 = vsel %vm1223, %v1225, %v1221
      %v1227 = vmul.f32 1.0, %v1226
      %v1228 = vrcp.pop %v1000
      %v1229 = vmul.f32 %v1000, %v1228
      %v1230 = vsub.f32 1.0, %v1229
      %v1231 = vmul.f32 %v1228, %v1230
      %v1232 = vadd.f32 %v1228, %v1231
      %vm1233 = vweird.f32 %v1000
      %vm1234 = vweird.f32 %v1228
      %vm1235 = vmor %vm1233, %vm1234
      %v1236 = vsel %vm1235, %v1228, %v1232
      %v1237 = vand.u32 2147483647, %v1000
      %vm1238 = vcmp.eq.f32.partialorder %v1237, 8.507059e+37
      %v1239 = vand.u32 %v1000, 2147483648
      %v1240 = vor.u32 1.1754944e-38, %v1239
      %v1241 = vsel %vm1238, %v1240, %v1236
      %v1242 = vmul.f32 1.0, %v1241
      %v1243 = vrcp.pop %v1001
      %v1244 = vmul.f32 %v1001, %v1243
      %v1245 = vsub.f32 1.0, %v1244
      %v1246 = vmul.f32 %v1243, %v1245
      %v1247 = vadd.f32 %v1243, %v1246
      %vm1248 = vweird.f32 %v1001
      %vm1249 = vweird.f32 %v1243
      %vm1250 = vmor %vm1248, %vm1249
      %v1251 = vsel %vm1250, %v1243, %v1247
      %v1252 = vand.u32 2147483647, %v1001
      %vm1253 = vcmp.eq.f32.partialorder %v1252, 8.507059e+37
      %v1254 = vand.u32 %v1001, 2147483648
      %v1255 = vor.u32 1.1754944e-38, %v1254
      %v1256 = vsel %vm1253, %v1255, %v1251
      %v1257 = vmul.f32 1.0, %v1256
      %v1258 = vrcp.pop %v1002
      %v1259 = vmul.f32 %v1002, %v1258
      %v1260 = vsub.f32 1.0, %v1259
      %v1261 = vmul.f32 %v1258, %v1260
      %v1262 = vadd.f32 %v1258, %v1261
      %vm1263 = vweird.f32 %v1002
      %vm1264 = vweird.f32 %v1258
      %vm1265 = vmor %vm1263, %vm1264
      %v1266 = vsel %vm1265, %v1258, %v1262
      %v1267 = vand.u32 2147483647, %v1002
      %vm1268 = vcmp.eq.f32.partialorder %v1267, 8.507059e+37
      %v1269 = vand.u32 %v1002, 2147483648
      %v1270 = vor.u32 1.1754944e-38, %v1269
      %v1271 = vsel %vm1268, %v1270, %v1266
      %v1272 = vmul.f32 1.0, %v1271
      %v1273 = vrcp.pop %v1003
      %v1274 = vmul.f32 %v1003, %v1273
      %v1275 = vsub.f32 1.0, %v1274
      %v1276 = vmul.f32 %v1273, %v1275
      %v1277 = vadd.f32 %v1273, %v1276
      %vm1278 = vweird.f32 %v1003
      %vm1279 = vweird.f32 %v1273
      %vm1280 = vmor %vm1278, %vm1279
      %v1281 = vsel %vm1280, %v1273, %v1277
      %v1282 = vand.u32 2147483647, %v1003
      %vm1283 = vcmp.eq.f32.partialorder %v1282, 8.507059e+37
      %v1284 = vand.u32 %v1003, 2147483648
      %v1285 = vor.u32 1.1754944e-38, %v1284
      %v1286 = vsel %vm1283, %v1285, %v1281
      %v1287 = vmul.f32 1.0, %v1286
      %v1288 = vrcp.pop %v1004
      %v1289 = vmul.f32 %v1004, %v1288
      %v1290 = vsub.f32 1.0, %v1289
      %v1291 = vmul.f32 %v1288, %v1290
      %v1292 = vadd.f32 %v1288, %v1291
      %vm1293 = vweird.f32 %v1004
      %vm1294 = vweird.f32 %v1288
      %vm1295 = vmor %vm1293, %vm1294
      %v1296 = vsel %vm1295, %v1288, %v1292
      %v1297 = vand.u32 2147483647, %v1004
      %vm1298 = vcmp.eq.f32.partialorder %v1297, 8.507059e+37
      %v1299 = vand.u32 %v1004, 2147483648
      %v1300 = vor.u32 1.1754944e-38, %v1299
      %v1301 = vsel %vm1298, %v1300, %v1296
      %v1302 = vmul.f32 1.0, %v1301
      %v1303 = vrcp.pop %v1005
      %v1304 = vmul.f32 %v1005, %v1303
      %v1305 = vsub.f32 1.0, %v1304
      %v1306 = vmul.f32 %v1303, %v1305
      %v1307 = vadd.f32 %v1303, %v1306
      %vm1308 = vweird.f32 %v1005
      %vm1309 = vweird.f32 %v1303
      %vm1310 = vmor %vm1308, %vm1309
      %v1311 = vsel %vm1310, %v1303, %v1307
      %v1312 = vand.u32 2147483647, %v1005
      %vm1313 = vcmp.eq.f32.partialorder %v1312, 8.507059e+37
      %v1314 = vand.u32 %v1005, 2147483648
      %v1315 = vor.u32 1.1754944e-38, %v1314
      %v1316 = vsel %vm1313, %v1315, %v1311
      %v1317 = vmul.f32 1.0, %v1316
      %v1318 = vrcp.pop %v1006
      %v1319 = vmul.f32 %v1006, %v1318
      %v1320 = vsub.f32 1.0, %v1319
      %v1321 = vmul.f32 %v1318, %v1320
      %v1322 = vadd.f32 %v1318, %v1321
      %vm1323 = vweird.f32 %v1006
      %vm1324 = vweird.f32 %v1318
      %vm1325 = vmor %vm1323, %vm1324
      %v1326 = vsel %vm1325, %v1318, %v1322
      %v1327 = vand.u32 2147483647, %v1006
      %vm1328 = vcmp.eq.f32.partialorder %v1327, 8.507059e+37
      %v1329 = vand.u32 %v1006, 2147483648
      %v1330 = vor.u32 1.1754944e-38, %v1329
      %v1331 = vsel %vm1328, %v1330, %v1326
      %v1332 = vmul.f32 1.0, %v1331
      %v1333 = vrcp.pop %v1007
      %v1334 = vmul.f32 %v1007, %v1333
      %v1335 = vsub.f32 1.0, %v1334
      %v1336 = vmul.f32 %v1333, %v1335
      %v1337 = vadd.f32 %v1333, %v1336
      %vm1338 = vweird.f32 %v1007
      %vm1339 = vweird.f32 %v1333
      %vm1340 = vmor %vm1338, %vm1339
      %v1341 = vsel %vm1340, %v1333, %v1337
      %v1342 = vand.u32 2147483647, %v1007
      %vm1343 = vcmp.eq.f32.partialorder %v1342, 8.507059e+37
      %v1344 = vand.u32 %v1007, 2147483648
      %v1345 = vor.u32 1.1754944e-38, %v1344
      %v1346 = vsel %vm1343, %v1345, %v1341
      %v1347 = vmul.f32 1.0, %v1346
      %v1348 = vrcp.pop %v1008
      %v1349 = vmul.f32 %v1008, %v1348
      %v1350 = vsub.f32 1.0, %v1349
      %v1351 = vmul.f32 %v1348, %v1350
      %v1352 = vadd.f32 %v1348, %v1351
      %vm1353 = vweird.f32 %v1008
      %vm1354 = vweird.f32 %v1348
      %vm1355 = vmor %vm1353, %vm1354
      %v1356 = vsel %vm1355, %v1348, %v1352
      %v1357 = vand.u32 2147483647, %v1008
      %vm1358 = vcmp.eq.f32.partialorder %v1357, 8.507059e+37
      %v1359 = vand.u32 %v1008, 2147483648
      %v1360 = vor.u32 1.1754944e-38, %v1359
      %v1361 = vsel %vm1358, %v1360, %v1356
      %v1362 = vmul.f32 1.0, %v1361
      %v1363 = vrcp.pop %v1009
      %v1364 = vmul.f32 %v1009, %v1363
      %v1365 = vsub.f32 1.0, %v1364
      %v1366 = vmul.f32 %v1363, %v1365
      %v1367 = vadd.f32 %v1363, %v1366
      %vm1368 = vweird.f32 %v1009
      %vm1369 = vweird.f32 %v1363
      %vm1370 = vmor %vm1368, %vm1369
      %v1371 = vsel %vm1370, %v1363, %v1367
      %v1372 = vand.u32 2147483647, %v1009
      %vm1373 = vcmp.eq.f32.partialorder %v1372, 8.507059e+37
      %v1374 = vand.u32 %v1009, 2147483648
      %v1375 = vor.u32 1.1754944e-38, %v1374
      %v1376 = vsel %vm1373, %v1375, %v1371
      %v1377 = vmul.f32 1.0, %v1376
      %v1378 = vrcp.pop %v1010
      %v1379 = vmul.f32 %v1010, %v1378
      %v1380 = vsub.f32 1.0, %v1379
      %v1381 = vmul.f32 %v1378, %v1380
      %v1382 = vadd.f32 %v1378, %v1381
      %vm1383 = vweird.f32 %v1010
      %vm1384 = vweird.f32 %v1378
      %vm1385 = vmor %vm1383, %vm1384
      %v1386 = vsel %vm1385, %v1378, %v1382
      %v1387 = vand.u32 2147483647, %v1010
      %vm1388 = vcmp.eq.f32.partialorder %v1387, 8.507059e+37
      %v1389 = vand.u32 %v1010, 2147483648
      %v1390 = vor.u32 1.1754944e-38, %v1389
      %v1391 = vsel %vm1388, %v1390, %v1386
      %v1392 = vmul.f32 1.0, %v1391
      %v1393 = vrcp.pop %v1011
      %v1394 = vmul.f32 %v1011, %v1393
      %v1395 = vsub.f32 1.0, %v1394
      %v1396 = vmul.f32 %v1393, %v1395
      %v1397 = vadd.f32 %v1393, %v1396
      %vm1398 = vweird.f32 %v1011
      %vm1399 = vweird.f32 %v1393
      %vm1400 = vmor %vm1398, %vm1399
      %v1401 = vsel %vm1400, %v1393, %v1397
      %v1402 = vand.u32 2147483647, %v1011
      %vm1403 = vcmp.eq.f32.partialorder %v1402, 8.507059e+37
      %v1404 = vand.u32 %v1011, 2147483648
      %v1405 = vor.u32 1.1754944e-38, %v1404
      %v1406 = vsel %vm1403, %v1405, %v1401
      %v1407 = vmul.f32 1.0, %v1406
      %v1408 = vrcp.pop %v1012
      %v1409 = vmul.f32 %v1012, %v1408
      %v1410 = vsub.f32 1.0, %v1409
      %v1411 = vmul.f32 %v1408, %v1410
      %v1412 = vadd.f32 %v1408, %v1411
      %vm1413 = vweird.f32 %v1012
      %vm1414 = vweird.f32 %v1408
      %vm1415 = vmor %vm1413, %vm1414
      %v1416 = vsel %vm1415, %v1408, %v1412
      %v1417 = vand.u32 2147483647, %v1012
      %vm1418 = vcmp.eq.f32.partialorder %v1417, 8.507059e+37
      %v1419 = vand.u32 %v1012, 2147483648
      %v1420 = vor.u32 1.1754944e-38, %v1419
      %v1421 = vsel %vm1418, %v1420, %v1416
      %v1422 = vmul.f32 1.0, %v1421
      %v1423 = vrcp.pop %v1013
      %v1424 = vmul.f32 %v1013, %v1423
      %v1425 = vsub.f32 1.0, %v1424
      %v1426 = vmul.f32 %v1423, %v1425
      %v1427 = vadd.f32 %v1423, %v1426
      %vm1428 = vweird.f32 %v1013
      %vm1429 = vweird.f32 %v1423
      %vm1430 = vmor %vm1428, %vm1429
      %v1431 = vsel %vm1430, %v1423, %v1427
      %v1432 = vand.u32 2147483647, %v1013
      %vm1433 = vcmp.eq.f32.partialorder %v1432, 8.507059e+37
      %v1434 = vand.u32 %v1013, 2147483648
      %v1435 = vor.u32 1.1754944e-38, %v1434
      %v1436 = vsel %vm1433, %v1435, %v1431
      %v1437 = vmul.f32 1.0, %v1436
      %v1438 = vrcp.pop %v1014
      %v1439 = vmul.f32 %v1014, %v1438
      %v1440 = vsub.f32 1.0, %v1439
      %v1441 = vmul.f32 %v1438, %v1440
      %v1442 = vadd.f32 %v1438, %v1441
      %vm1443 = vweird.f32 %v1014
      %vm1444 = vweird.f32 %v1438
      %vm1445 = vmor %vm1443, %vm1444
      %v1446 = vsel %vm1445, %v1438, %v1442
      %v1447 = vand.u32 2147483647, %v1014
      %vm1448 = vcmp.eq.f32.partialorder %v1447, 8.507059e+37
      %v1449 = vand.u32 %v1014, 2147483648
      %v1450 = vor.u32 1.1754944e-38, %v1449
      %v1451 = vsel %vm1448, %v1450, %v1446
      %v1452 = vmul.f32 1.0, %v1451
      %v1453 = vrcp.pop %v1015
      %v1454 = vmul.f32 %v1015, %v1453
      %v1455 = vsub.f32 1.0, %v1454
      %v1456 = vmul.f32 %v1453, %v1455
      %v1457 = vadd.f32 %v1453, %v1456
      %vm1458 = vweird.f32 %v1015
      %vm1459 = vweird.f32 %v1453
      %vm1460 = vmor %vm1458, %vm1459
      %v1461 = vsel %vm1460, %v1453, %v1457
      %v1462 = vand.u32 2147483647, %v1015
      %vm1463 = vcmp.eq.f32.partialorder %v1462, 8.507059e+37
      %v1464 = vand.u32 %v1015, 2147483648
      %v1465 = vor.u32 1.1754944e-38, %v1464
      %v1466 = vsel %vm1463, %v1465, %v1461
      %v1467 = vmul.f32 1.0, %v1466
      %v1468 = vrcp.pop %v1016
      %v1469 = vmul.f32 %v1016, %v1468
      %v1470 = vsub.f32 1.0, %v1469
      %v1471 = vmul.f32 %v1468, %v1470
      %v1472 = vadd.f32 %v1468, %v1471
      %vm1473 = vweird.f32 %v1016
      %vm1474 = vweird.f32 %v1468
      %vm1475 = vmor %vm1473, %vm1474
      %v1476 = vsel %vm1475, %v1468, %v1472
      %v1477 = vand.u32 2147483647, %v1016
      %vm1478 = vcmp.eq.f32.partialorder %v1477, 8.507059e+37
      %v1479 = vand.u32 %v1016, 2147483648
      %v1480 = vor.u32 1.1754944e-38, %v1479
      %v1481 = vsel %vm1478, %v1480, %v1476
      %v1482 = vmul.f32 1.0, %v1481
      %v1483 = vrcp.pop %v1017
      %v1484 = vmul.f32 %v1017, %v1483
      %v1485 = vsub.f32 1.0, %v1484
      %v1486 = vmul.f32 %v1483, %v1485
      %v1487 = vadd.f32 %v1483, %v1486
      %vm1488 = vweird.f32 %v1017
      %vm1489 = vweird.f32 %v1483
      %vm1490 = vmor %vm1488, %vm1489
      %v1491 = vsel %vm1490, %v1483, %v1487
      %v1492 = vand.u32 2147483647, %v1017
      %vm1493 = vcmp.eq.f32.partialorder %v1492, 8.507059e+37
      %v1494 = vand.u32 %v1017, 2147483648
      %v1495 = vor.u32 1.1754944e-38, %v1494
      %v1496 = vsel %vm1493, %v1495, %v1491
      %v1497 = vmul.f32 1.0, %v1496
      %v1498 = vld [vmem:[%s5] sm:$0xff]
      %v1499 = vld [vmem:[%s5 + $0x8] sm:$0xff]
      %v1500 = vld [vmem:[%s5 + $0x10] sm:$0xff]
      %v1501 = vld [vmem:[%s5 + $0x18] sm:$0xff]
      %v1502 = vld [vmem:[%s6] sm:$0x1]
      %v1504 = vperm.slane %v1502, 0
      %vm1506 = vcmask 261120
      %v1508 = vsel %vm1506, %v1032, 0
      %v1511 = vsel %vm1506, %v1047, 0
      %v1514 = vsel %vm1506, %v1062, 0
      %v1517 = vsel %vm1506, %v1077, 0
      %v1520 = vsel %vm1506, %v1092, 0
      %v1523 = vsel %vm1506, %v1107, 0
      %v1526 = vsel %vm1506, %v1122, 0
      %v1529 = vsel %vm1506, %v1137, 0
      %v1532 = vsel %vm1506, %v1152, 0
      %v1535 = vsel %vm1506, %v1167, 0
      %v1538 = vsel %vm1506, %v1182, 0
      %v1541 = vsel %vm1506, %v1197, 0
      %v1544 = vsel %vm1506, %v1212, 0
      %v1547 = vsel %vm1506, %v1227, 0
      %v1550 = vsel %vm1506, %v1242, 0
      %v1553 = vsel %vm1506, %v1257, 0
      %v1556 = vsel %vm1506, %v1272, 0
      %v1559 = vsel %vm1506, %v1287, 0
      %v1562 = vsel %vm1506, %v1302, 0
      %v1565 = vsel %vm1506, %v1317, 0
      %v1568 = vsel %vm1506, %v1332, 0
      %v1571 = vsel %vm1506, %v1347, 0
      %v1574 = vsel %vm1506, %v1362, 0
      %v1577 = vsel %vm1506, %v1377, 0
      %v1580 = vsel %vm1506, %v1392, 0
      %v1583 = vsel %vm1506, %v1407, 0
      %v1586 = vsel %vm1506, %v1422, 0
      %v1589 = vsel %vm1506, %v1437, 0
      %v1592 = vsel %vm1506, %v1452, 0
      %v1595 = vsel %vm1506, %v1467, 0
      %v1598 = vsel %vm1506, %v1482, 0
      %v1601 = vsel %vm1506, %v1497, 0
      %1603 = vmatpush.msra.mxu0 0.0
      %1604 = vmatpush.msra.mxu0 0.0
      %1605 = vmatpush.msra.mxu0 0.0
      %1606 = vmatpush.msra.mxu0 0.0
      %1607 = vmatpush.msra.mxu0 0.0
      %1608 = vmatpush.msra.mxu0 0.0
      %1609 = vmatpush.msra.mxu0 0.0
      %1610 = vmatpush.msra.mxu0 0.0
      %1611 = vmatpush.msra.mxu0 0.0
      %1612 = vmatpush.msra.mxu0 0.0
      %1613 = vmatpush.msra.mxu0 0.0
      %1614 = vmatpush.msra.mxu0 0.0
      %1615 = vmatpush.msra.mxu0 %v1501
      %1616 = vmatpush.msra.mxu0 %v1500
      %1617 = vmatpush.msra.mxu0 %v1499
      %1618 = vmatpush.msra.mxu0 %v1498
      %1619 = vmatmul.f32.gmra.mxu0 %v1508
      %v1620 = vpop.f32.mrf.mxu0
      %v1621 = vadd.f32 %v1504, %v1620
      %1622 = vmatmul.f32.gmra.mxu0 %v1511
      %v1623 = vpop.f32.mrf.mxu0
      %v1624 = vadd.f32 %v1504, %v1623
      %1625 = vmatmul.f32.gmra.mxu0 %v1514
      %v1626 = vpop.f32.mrf.mxu0
      %v1627 = vadd.f32 %v1504, %v1626
      %1628 = vmatmul.f32.gmra.mxu0 %v1517
      %v1629 = vpop.f32.mrf.mxu0
      %v1630 = vadd.f32 %v1504, %v1629
      %1631 = vmatmul.f32.gmra.mxu0 %v1520
      %v1632 = vpop.f32.mrf.mxu0
      %v1633 = vadd.f32 %v1504, %v1632
      %1634 = vmatmul.f32.gmra.mxu0 %v1523
      %v1635 = vpop.f32.mrf.mxu0
      %v1636 = vadd.f32 %v1504, %v1635
      %1637 = vmatmul.f32.gmra.mxu0 %v1526
      %v1638 = vpop.f32.mrf.mxu0
      %v1639 = vadd.f32 %v1504, %v1638
      %1640 = vmatmul.f32.gmra.mxu0 %v1529
      %v1641 = vpop.f32.mrf.mxu0
      %v1642 = vadd.f32 %v1504, %v1641
      %1643 = vmatmul.f32.gmra.mxu0 %v1532
      %v1644 = vpop.f32.mrf.mxu0
      %v1645 = vadd.f32 %v1504, %v1644
      %1646 = vmatmul.f32.gmra.mxu0 %v1535
      %v1647 = vpop.f32.mrf.mxu0
      %v1648 = vadd.f32 %v1504, %v1647
      %1649 = vmatmul.f32.gmra.mxu0 %v1538
      %v1650 = vpop.f32.mrf.mxu0
      %v1651 = vadd.f32 %v1504, %v1650
      %1652 = vmatmul.f32.gmra.mxu0 %v1541
      %v1653 = vpop.f32.mrf.mxu0
      %v1654 = vadd.f32 %v1504, %v1653
      %1655 = vmatmul.f32.gmra.mxu0 %v1544
      %v1656 = vpop.f32.mrf.mxu0
      %v1657 = vadd.f32 %v1504, %v1656
      %1658 = vmatmul.f32.gmra.mxu0 %v1547
      %v1659 = vpop.f32.mrf.mxu0
      %v1660 = vadd.f32 %v1504, %v1659
      %1661 = vmatmul.f32.gmra.mxu0 %v1550
      %v1662 = vpop.f32.mrf.mxu0
      %v1663 = vadd.f32 %v1504, %v1662
      %1664 = vmatmul.f32.gmra.mxu0 %v1553
      %v1665 = vpop.f32.mrf.mxu0
      %v1666 = vadd.f32 %v1504, %v1665
      %1667 = vmatmul.f32.gmra.mxu0 %v1556
      %v1668 = vpop.f32.mrf.mxu0
      %v1669 = vadd.f32 %v1504, %v1668
      %1670 = vmatmul.f32.gmra.mxu0 %v1559
      %v1671 = vpop.f32.mrf.mxu0
      %v1672 = vadd.f32 %v1504, %v1671
      %1673 = vmatmul.f32.gmra.mxu0 %v1562
      %v1674 = vpop.f32.mrf.mxu0
      %v1675 = vadd.f32 %v1504, %v1674
      %1676 = vmatmul.f32.gmra.mxu0 %v1565
      %v1677 = vpop.f32.mrf.mxu0
      %v1678 = vadd.f32 %v1504, %v1677
      %1679 = vmatmul.f32.gmra.mxu0 %v1568
      %v1680 = vpop.f32.mrf.mxu0
      %v1681 = vadd.f32 %v1504, %v1680
      %1682 = vmatmul.f32.gmra.mxu0 %v1571
      %v1683 = vpop.f32.mrf.mxu0
      %v1684 = vadd.f32 %v1504, %v1683
      %1685 = vmatmul.f32.gmra.mxu0 %v1574
      %v1686 = vpop.f32.mrf.mxu0
      %v1687 = vadd.f32 %v1504, %v1686
      %1688 = vmatmul.f32.gmra.mxu0 %v1577
      %v1689 = vpop.f32.mrf.mxu0
      %v1690 = vadd.f32 %v1504, %v1689
      %1691 = vmatmul.f32.gmra.mxu0 %v1580
      %v1692 = vpop.f32.mrf.mxu0
      %v1693 = vadd.f32 %v1504, %v1692
      %1694 = vmatmul.f32.gmra.mxu0 %v1583
      %v1695 = vpop.f32.mrf.mxu0
      %v1696 = vadd.f32 %v1504, %v1695
      %1697 = vmatmul.f32.gmra.mxu0 %v1586
      %v1698 = vpop.f32.mrf.mxu0
      %v1699 = vadd.f32 %v1504, %v1698
      %1700 = vmatmul.f32.gmra.mxu0 %v1589
      %v1701 = vpop.f32.mrf.mxu0
      %v1702 = vadd.f32 %v1504, %v1701
      %1703 = vmatmul.f32.gmra.mxu0 %v1592
      %v1704 = vpop.f32.mrf.mxu0
      %v1705 = vadd.f32 %v1504, %v1704
      %1706 = vmatmul.f32.gmra.mxu0 %v1595
      %v1707 = vpop.f32.mrf.mxu0
      %v1708 = vadd.f32 %v1504, %v1707
      %1709 = vmatmul.f32.gmra.mxu0 %v1598
      %v1710 = vpop.f32.mrf.mxu0
      %v1711 = vadd.f32 %v1504, %v1710
      %1712 = vmatmul.f32.gmra.mxu0 %v1601
      %v1713 = vpop.f32.mrf.mxu0
      %v1714 = vadd.f32 %v1504, %v1713
      %1715 = vdwg.mxu0
      %v1716 = vxor.u32 %v1621, 2147483648
      %v1717 = vxor.u32 %v1624, 2147483648
      %v1718 = vxor.u32 %v1627, 2147483648
      %v1719 = vxor.u32 %v1630, 2147483648
      %v1720 = vxor.u32 %v1633, 2147483648
      %v1721 = vxor.u32 %v1636, 2147483648
      %v1722 = vxor.u32 %v1639, 2147483648
      %v1723 = vxor.u32 %v1642, 2147483648
      %v1724 = vxor.u32 %v1645, 2147483648
      %v1725 = vxor.u32 %v1648, 2147483648
      %v1726 = vxor.u32 %v1651, 2147483648
      %v1727 = vxor.u32 %v1654, 2147483648
      %v1728 = vxor.u32 %v1657, 2147483648
      %v1729 = vxor.u32 %v1660, 2147483648
      %v1730 = vxor.u32 %v1663, 2147483648
      %v1731 = vxor.u32 %v1666, 2147483648
      %v1732 = vxor.u32 %v1669, 2147483648
      %v1733 = vxor.u32 %v1672, 2147483648
      %v1734 = vxor.u32 %v1675, 2147483648
      %v1735 = vxor.u32 %v1678, 2147483648
      %v1736 = vxor.u32 %v1681, 2147483648
      %v1737 = vxor.u32 %v1684, 2147483648
      %v1738 = vxor.u32 %v1687, 2147483648
      %v1739 = vxor.u32 %v1690, 2147483648
      %v1740 = vxor.u32 %v1693, 2147483648
      %v1741 = vxor.u32 %v1696, 2147483648
      %v1742 = vxor.u32 %v1699, 2147483648
      %v1743 = vxor.u32 %v1702, 2147483648
      %v1744 = vxor.u32 %v1705, 2147483648
      %v1745 = vxor.u32 %v1708, 2147483648
      %v1746 = vxor.u32 %v1711, 2147483648
      %v1747 = vxor.u32 %v1714, 2147483648
      %v1748 = vmul.f32 %v1716, 1.442695
      %v1749 = vpow.pop %v1748
      %v1750 = vmul.f32 %v1717, 1.442695
      %v1751 = vpow.pop %v1750
      %v1752 = vmul.f32 %v1718, 1.442695
      %v1753 = vpow.pop %v1752
      %v1754 = vmul.f32 %v1719, 1.442695
      %v1755 = vpow.pop %v1754
      %v1756 = vmul.f32 %v1720, 1.442695
      %v1757 = vpow.pop %v1756
      %v1758 = vmul.f32 %v1721, 1.442695
      %v1759 = vpow.pop %v1758
      %v1760 = vmul.f32 %v1722, 1.442695
      %v1761 = vpow.pop %v1760
      %v1762 = vmul.f32 %v1723, 1.442695
      %v1763 = vpow.pop %v1762
      %v1764 = vmul.f32 %v1724, 1.442695
      %v1765 = vpow.pop %v1764
      %v1766 = vmul.f32 %v1725, 1.442695
      %v1767 = vpow.pop %v1766
      %v1768 = vmul.f32 %v1726, 1.442695
      %v1769 = vpow.pop %v1768
      %v1770 = vmul.f32 %v1727, 1.442695
      %v1771 = vpow.pop %v1770
      %v1772 = vmul.f32 %v1728, 1.442695
      %v1773 = vpow.pop %v1772
      %v1774 = vmul.f32 %v1729, 1.442695
      %v1775 = vpow.pop %v1774
      %v1776 = vmul.f32 %v1730, 1.442695
      %v1777 = vpow.pop %v1776
      %v1778 = vmul.f32 %v1731, 1.442695
      %v1779 = vpow.pop %v1778
      %v1780 = vmul.f32 %v1732, 1.442695
      %v1781 = vpow.pop %v1780
      %v1782 = vmul.f32 %v1733, 1.442695
      %v1783 = vpow.pop %v1782
      %v1784 = vmul.f32 %v1734, 1.442695
      %v1785 = vpow.pop %v1784
      %v1786 = vmul.f32 %v1735, 1.442695
      %v1787 = vpow.pop %v1786
      %v1788 = vmul.f32 %v1736, 1.442695
      %v1789 = vpow.pop %v1788
      %v1790 = vmul.f32 %v1737, 1.442695
      %v1791 = vpow.pop %v1790
      %v1792 = vmul.f32 %v1738, 1.442695
      %v1793 = vpow.pop %v1792
      %v1794 = vmul.f32 %v1739, 1.442695
      %v1795 = vpow.pop %v1794
      %v1796 = vmul.f32 %v1740, 1.442695
      %v1797 = vpow.pop %v1796
      %v1798 = vmul.f32 %v1741, 1.442695
      %v1799 = vpow.pop %v1798
      %v1800 = vmul.f32 %v1742, 1.442695
      %v1801 = vpow.pop %v1800
      %v1802 = vmul.f32 %v1743, 1.442695
      %v1803 = vpow.pop %v1802
      %v1804 = vmul.f32 %v1744, 1.442695
      %v1805 = vpow.pop %v1804
      %v1806 = vmul.f32 %v1745, 1.442695
      %v1807 = vpow.pop %v1806
      %v1808 = vmul.f32 %v1746, 1.442695
      %v1809 = vpow.pop %v1808
      %v1810 = vmul.f32 %v1747, 1.442695
      %v1811 = vpow.pop %v1810
      %v1812 = vadd.f32 %v1749, 1.0
      %v1813 = vadd.f32 %v1751, 1.0
      %v1814 = vadd.f32 %v1753, 1.0
      %v1815 = vadd.f32 %v1755, 1.0
      %v1816 = vadd.f32 %v1757, 1.0
      %v1817 = vadd.f32 %v1759, 1.0
      %v1818 = vadd.f32 %v1761, 1.0
      %v1819 = vadd.f32 %v1763, 1.0
      %v1820 = vadd.f32 %v1765, 1.0
      %v1821 = vadd.f32 %v1767, 1.0
      %v1822 = vadd.f32 %v1769, 1.0
      %v1823 = vadd.f32 %v1771, 1.0
      %v1824 = vadd.f32 %v1773, 1.0
      %v1825 = vadd.f32 %v1775, 1.0
      %v1826 = vadd.f32 %v1777, 1.0
      %v1827 = vadd.f32 %v1779, 1.0
      %v1828 = vadd.f32 %v1781, 1.0
      %v1829 = vadd.f32 %v1783, 1.0
      %v1830 = vadd.f32 %v1785, 1.0
      %v1831 = vadd.f32 %v1787, 1.0
      %v1832 = vadd.f32 %v1789, 1.0
      %v1833 = vadd.f32 %v1791, 1.0
      %v1834 = vadd.f32 %v1793, 1.0
      %v1835 = vadd.f32 %v1795, 1.0
      %v1836 = vadd.f32 %v1797, 1.0
      %v1837 = vadd.f32 %v1799, 1.0
      %v1838 = vadd.f32 %v1801, 1.0
      %v1839 = vadd.f32 %v1803, 1.0
      %v1840 = vadd.f32 %v1805, 1.0
      %v1841 = vadd.f32 %v1807, 1.0
      %v1842 = vadd.f32 %v1809, 1.0
      %v1843 = vadd.f32 %v1811, 1.0
      %v1844 = vrcp.pop %v1812
      %v1845 = vmul.f32 %v1812, %v1844
      %v1846 = vsub.f32 1.0, %v1845
      %v1847 = vmul.f32 %v1844, %v1846
      %v1848 = vadd.f32 %v1844, %v1847
      %vm1849 = vweird.f32 %v1812
      %vm1850 = vweird.f32 %v1844
      %vm1851 = vmor %vm1849, %vm1850
      %v1852 = vsel %vm1851, %v1844, %v1848
      %v1853 = vand.u32 2147483647, %v1812
      %vm1854 = vcmp.eq.f32.partialorder %v1853, 8.507059e+37
      %v1855 = vand.u32 %v1812, 2147483648
      %v1856 = vor.u32 1.1754944e-38, %v1855
      %v1857 = vsel %vm1854, %v1856, %v1852
      %v1858 = vmul.f32 1.0, %v1857
      %v1859 = vrcp.pop %v1813
      %v1860 = vmul.f32 %v1813, %v1859
      %v1861 = vsub.f32 1.0, %v1860
      %v1862 = vmul.f32 %v1859, %v1861
      %v1863 = vadd.f32 %v1859, %v1862
      %vm1864 = vweird.f32 %v1813
      %vm1865 = vweird.f32 %v1859
      %vm1866 = vmor %vm1864, %vm1865
      %v1867 = vsel %vm1866, %v1859, %v1863
      %v1868 = vand.u32 2147483647, %v1813
      %vm1869 = vcmp.eq.f32.partialorder %v1868, 8.507059e+37
      %v1870 = vand.u32 %v1813, 2147483648
      %v1871 = vor.u32 1.1754944e-38, %v1870
      %v1872 = vsel %vm1869, %v1871, %v1867
      %v1873 = vmul.f32 1.0, %v1872
      %v1874 = vrcp.pop %v1814
      %v1875 = vmul.f32 %v1814, %v1874
      %v1876 = vsub.f32 1.0, %v1875
      %v1877 = vmul.f32 %v1874, %v1876
      %v1878 = vadd.f32 %v1874, %v1877
      %vm1879 = vweird.f32 %v1814
      %vm1880 = vweird.f32 %v1874
      %vm1881 = vmor %vm1879, %vm1880
      %v1882 = vsel %vm1881, %v1874, %v1878
      %v1883 = vand.u32 2147483647, %v1814
      %vm1884 = vcmp.eq.f32.partialorder %v1883, 8.507059e+37
      %v1885 = vand.u32 %v1814, 2147483648
      %v1886 = vor.u32 1.1754944e-38, %v1885
      %v1887 = vsel %vm1884, %v1886, %v1882
      %v1888 = vmul.f32 1.0, %v1887
      %v1889 = vrcp.pop %v1815
      %v1890 = vmul.f32 %v1815, %v1889
      %v1891 = vsub.f32 1.0, %v1890
      %v1892 = vmul.f32 %v1889, %v1891
      %v1893 = vadd.f32 %v1889, %v1892
      %vm1894 = vweird.f32 %v1815
      %vm1895 = vweird.f32 %v1889
      %vm1896 = vmor %vm1894, %vm1895
      %v1897 = vsel %vm1896, %v1889, %v1893
      %v1898 = vand.u32 2147483647, %v1815
      %vm1899 = vcmp.eq.f32.partialorder %v1898, 8.507059e+37
      %v1900 = vand.u32 %v1815, 2147483648
      %v1901 = vor.u32 1.1754944e-38, %v1900
      %v1902 = vsel %vm1899, %v1901, %v1897
      %v1903 = vmul.f32 1.0, %v1902
      %v1904 = vrcp.pop %v1816
      %v1905 = vmul.f32 %v1816, %v1904
      %v1906 = vsub.f32 1.0, %v1905
      %v1907 = vmul.f32 %v1904, %v1906
      %v1908 = vadd.f32 %v1904, %v1907
      %vm1909 = vweird.f32 %v1816
      %vm1910 = vweird.f32 %v1904
      %vm1911 = vmor %vm1909, %vm1910
      %v1912 = vsel %vm1911, %v1904, %v1908
      %v1913 = vand.u32 2147483647, %v1816
      %vm1914 = vcmp.eq.f32.partialorder %v1913, 8.507059e+37
      %v1915 = vand.u32 %v1816, 2147483648
      %v1916 = vor.u32 1.1754944e-38, %v1915
      %v1917 = vsel %vm1914, %v1916, %v1912
      %v1918 = vmul.f32 1.0, %v1917
      %v1919 = vrcp.pop %v1817
      %v1920 = vmul.f32 %v1817, %v1919
      %v1921 = vsub.f32 1.0, %v1920
      %v1922 = vmul.f32 %v1919, %v1921
      %v1923 = vadd.f32 %v1919, %v1922
      %vm1924 = vweird.f32 %v1817
      %vm1925 = vweird.f32 %v1919
      %vm1926 = vmor %vm1924, %vm1925
      %v1927 = vsel %vm1926, %v1919, %v1923
      %v1928 = vand.u32 2147483647, %v1817
      %vm1929 = vcmp.eq.f32.partialorder %v1928, 8.507059e+37
      %v1930 = vand.u32 %v1817, 2147483648
      %v1931 = vor.u32 1.1754944e-38, %v1930
      %v1932 = vsel %vm1929, %v1931, %v1927
      %v1933 = vmul.f32 1.0, %v1932
      %v1934 = vrcp.pop %v1818
      %v1935 = vmul.f32 %v1818, %v1934
      %v1936 = vsub.f32 1.0, %v1935
      %v1937 = vmul.f32 %v1934, %v1936
      %v1938 = vadd.f32 %v1934, %v1937
      %vm1939 = vweird.f32 %v1818
      %vm1940 = vweird.f32 %v1934
      %vm1941 = vmor %vm1939, %vm1940
      %v1942 = vsel %vm1941, %v1934, %v1938
      %v1943 = vand.u32 2147483647, %v1818
      %vm1944 = vcmp.eq.f32.partialorder %v1943, 8.507059e+37
      %v1945 = vand.u32 %v1818, 2147483648
      %v1946 = vor.u32 1.1754944e-38, %v1945
      %v1947 = vsel %vm1944, %v1946, %v1942
      %v1948 = vmul.f32 1.0, %v1947
      %v1949 = vrcp.pop %v1819
      %v1950 = vmul.f32 %v1819, %v1949
      %v1951 = vsub.f32 1.0, %v1950
      %v1952 = vmul.f32 %v1949, %v1951
      %v1953 = vadd.f32 %v1949, %v1952
      %vm1954 = vweird.f32 %v1819
      %vm1955 = vweird.f32 %v1949
      %vm1956 = vmor %vm1954, %vm1955
      %v1957 = vsel %vm1956, %v1949, %v1953
      %v1958 = vand.u32 2147483647, %v1819
      %vm1959 = vcmp.eq.f32.partialorder %v1958, 8.507059e+37
      %v1960 = vand.u32 %v1819, 2147483648
      %v1961 = vor.u32 1.1754944e-38, %v1960
      %v1962 = vsel %vm1959, %v1961, %v1957
      %v1963 = vmul.f32 1.0, %v1962
      %v1964 = vrcp.pop %v1820
      %v1965 = vmul.f32 %v1820, %v1964
      %v1966 = vsub.f32 1.0, %v1965
      %v1967 = vmul.f32 %v1964, %v1966
      %v1968 = vadd.f32 %v1964, %v1967
      %vm1969 = vweird.f32 %v1820
      %vm1970 = vweird.f32 %v1964
      %vm1971 = vmor %vm1969, %vm1970
      %v1972 = vsel %vm1971, %v1964, %v1968
      %v1973 = vand.u32 2147483647, %v1820
      %vm1974 = vcmp.eq.f32.partialorder %v1973, 8.507059e+37
      %v1975 = vand.u32 %v1820, 2147483648
      %v1976 = vor.u32 1.1754944e-38, %v1975
      %v1977 = vsel %vm1974, %v1976, %v1972
      %v1978 = vmul.f32 1.0, %v1977
      %v1979 = vrcp.pop %v1821
      %v1980 = vmul.f32 %v1821, %v1979
      %v1981 = vsub.f32 1.0, %v1980
      %v1982 = vmul.f32 %v1979, %v1981
      %v1983 = vadd.f32 %v1979, %v1982
      %vm1984 = vweird.f32 %v1821
      %vm1985 = vweird.f32 %v1979
      %vm1986 = vmor %vm1984, %vm1985
      %v1987 = vsel %vm1986, %v1979, %v1983
      %v1988 = vand.u32 2147483647, %v1821
      %vm1989 = vcmp.eq.f32.partialorder %v1988, 8.507059e+37
      %v1990 = vand.u32 %v1821, 2147483648
      %v1991 = vor.u32 1.1754944e-38, %v1990
      %v1992 = vsel %vm1989, %v1991, %v1987
      %v1993 = vmul.f32 1.0, %v1992
      %v1994 = vrcp.pop %v1822
      %v1995 = vmul.f32 %v1822, %v1994
      %v1996 = vsub.f32 1.0, %v1995
      %v1997 = vmul.f32 %v1994, %v1996
      %v1998 = vadd.f32 %v1994, %v1997
      %vm1999 = vweird.f32 %v1822
      %vm2000 = vweird.f32 %v1994
      %vm2001 = vmor %vm1999, %vm2000
      %v2002 = vsel %vm2001, %v1994, %v1998
      %v2003 = vand.u32 2147483647, %v1822
      %vm2004 = vcmp.eq.f32.partialorder %v2003, 8.507059e+37
      %v2005 = vand.u32 %v1822, 2147483648
      %v2006 = vor.u32 1.1754944e-38, %v2005
      %v2007 = vsel %vm2004, %v2006, %v2002
      %v2008 = vmul.f32 1.0, %v2007
      %v2009 = vrcp.pop %v1823
      %v2010 = vmul.f32 %v1823, %v2009
      %v2011 = vsub.f32 1.0, %v2010
      %v2012 = vmul.f32 %v2009, %v2011
      %v2013 = vadd.f32 %v2009, %v2012
      %vm2014 = vweird.f32 %v1823
      %vm2015 = vweird.f32 %v2009
      %vm2016 = vmor %vm2014, %vm2015
      %v2017 = vsel %vm2016, %v2009, %v2013
      %v2018 = vand.u32 2147483647, %v1823
      %vm2019 = vcmp.eq.f32.partialorder %v2018, 8.507059e+37
      %v2020 = vand.u32 %v1823, 2147483648
      %v2021 = vor.u32 1.1754944e-38, %v2020
      %v2022 = vsel %vm2019, %v2021, %v2017
      %v2023 = vmul.f32 1.0, %v2022
      %v2024 = vrcp.pop %v1824
      %v2025 = vmul.f32 %v1824, %v2024
      %v2026 = vsub.f32 1.0, %v2025
      %v2027 = vmul.f32 %v2024, %v2026
      %v2028 = vadd.f32 %v2024, %v2027
      %vm2029 = vweird.f32 %v1824
      %vm2030 = vweird.f32 %v2024
      %vm2031 = vmor %vm2029, %vm2030
      %v2032 = vsel %vm2031, %v2024, %v2028
      %v2033 = vand.u32 2147483647, %v1824
      %vm2034 = vcmp.eq.f32.partialorder %v2033, 8.507059e+37
      %v2035 = vand.u32 %v1824, 2147483648
      %v2036 = vor.u32 1.1754944e-38, %v2035
      %v2037 = vsel %vm2034, %v2036, %v2032
      %v2038 = vmul.f32 1.0, %v2037
      %v2039 = vrcp.pop %v1825
      %v2040 = vmul.f32 %v1825, %v2039
      %v2041 = vsub.f32 1.0, %v2040
      %v2042 = vmul.f32 %v2039, %v2041
      %v2043 = vadd.f32 %v2039, %v2042
      %vm2044 = vweird.f32 %v1825
      %vm2045 = vweird.f32 %v2039
      %vm2046 = vmor %vm2044, %vm2045
      %v2047 = vsel %vm2046, %v2039, %v2043
      %v2048 = vand.u32 2147483647, %v1825
      %vm2049 = vcmp.eq.f32.partialorder %v2048, 8.507059e+37
      %v2050 = vand.u32 %v1825, 2147483648
      %v2051 = vor.u32 1.1754944e-38, %v2050
      %v2052 = vsel %vm2049, %v2051, %v2047
      %v2053 = vmul.f32 1.0, %v2052
      %v2054 = vrcp.pop %v1826
      %v2055 = vmul.f32 %v1826, %v2054
      %v2056 = vsub.f32 1.0, %v2055
      %v2057 = vmul.f32 %v2054, %v2056
      %v2058 = vadd.f32 %v2054, %v2057
      %vm2059 = vweird.f32 %v1826
      %vm2060 = vweird.f32 %v2054
      %vm2061 = vmor %vm2059, %vm2060
      %v2062 = vsel %vm2061, %v2054, %v2058
      %v2063 = vand.u32 2147483647, %v1826
      %vm2064 = vcmp.eq.f32.partialorder %v2063, 8.507059e+37
      %v2065 = vand.u32 %v1826, 2147483648
      %v2066 = vor.u32 1.1754944e-38, %v2065
      %v2067 = vsel %vm2064, %v2066, %v2062
      %v2068 = vmul.f32 1.0, %v2067
      %v2069 = vrcp.pop %v1827
      %v2070 = vmul.f32 %v1827, %v2069
      %v2071 = vsub.f32 1.0, %v2070
      %v2072 = vmul.f32 %v2069, %v2071
      %v2073 = vadd.f32 %v2069, %v2072
      %vm2074 = vweird.f32 %v1827
      %vm2075 = vweird.f32 %v2069
      %vm2076 = vmor %vm2074, %vm2075
      %v2077 = vsel %vm2076, %v2069, %v2073
      %v2078 = vand.u32 2147483647, %v1827
      %vm2079 = vcmp.eq.f32.partialorder %v2078, 8.507059e+37
      %v2080 = vand.u32 %v1827, 2147483648
      %v2081 = vor.u32 1.1754944e-38, %v2080
      %v2082 = vsel %vm2079, %v2081, %v2077
      %v2083 = vmul.f32 1.0, %v2082
      %v2084 = vrcp.pop %v1828
      %v2085 = vmul.f32 %v1828, %v2084
      %v2086 = vsub.f32 1.0, %v2085
      %v2087 = vmul.f32 %v2084, %v2086
      %v2088 = vadd.f32 %v2084, %v2087
      %vm2089 = vweird.f32 %v1828
      %vm2090 = vweird.f32 %v2084
      %vm2091 = vmor %vm2089, %vm2090
      %v2092 = vsel %vm2091, %v2084, %v2088
      %v2093 = vand.u32 2147483647, %v1828
      %vm2094 = vcmp.eq.f32.partialorder %v2093, 8.507059e+37
      %v2095 = vand.u32 %v1828, 2147483648
      %v2096 = vor.u32 1.1754944e-38, %v2095
      %v2097 = vsel %vm2094, %v2096, %v2092
      %v2098 = vmul.f32 1.0, %v2097
      %v2099 = vrcp.pop %v1829
      %v2100 = vmul.f32 %v1829, %v2099
      %v2101 = vsub.f32 1.0, %v2100
      %v2102 = vmul.f32 %v2099, %v2101
      %v2103 = vadd.f32 %v2099, %v2102
      %vm2104 = vweird.f32 %v1829
      %vm2105 = vweird.f32 %v2099
      %vm2106 = vmor %vm2104, %vm2105
      %v2107 = vsel %vm2106, %v2099, %v2103
      %v2108 = vand.u32 2147483647, %v1829
      %vm2109 = vcmp.eq.f32.partialorder %v2108, 8.507059e+37
      %v2110 = vand.u32 %v1829, 2147483648
      %v2111 = vor.u32 1.1754944e-38, %v2110
      %v2112 = vsel %vm2109, %v2111, %v2107
      %v2113 = vmul.f32 1.0, %v2112
      %v2114 = vrcp.pop %v1830
      %v2115 = vmul.f32 %v1830, %v2114
      %v2116 = vsub.f32 1.0, %v2115
      %v2117 = vmul.f32 %v2114, %v2116
      %v2118 = vadd.f32 %v2114, %v2117
      %vm2119 = vweird.f32 %v1830
      %vm2120 = vweird.f32 %v2114
      %vm2121 = vmor %vm2119, %vm2120
      %v2122 = vsel %vm2121, %v2114, %v2118
      %v2123 = vand.u32 2147483647, %v1830
      %vm2124 = vcmp.eq.f32.partialorder %v2123, 8.507059e+37
      %v2125 = vand.u32 %v1830, 2147483648
      %v2126 = vor.u32 1.1754944e-38, %v2125
      %v2127 = vsel %vm2124, %v2126, %v2122
      %v2128 = vmul.f32 1.0, %v2127
      %v2129 = vrcp.pop %v1831
      %v2130 = vmul.f32 %v1831, %v2129
      %v2131 = vsub.f32 1.0, %v2130
      %v2132 = vmul.f32 %v2129, %v2131
      %v2133 = vadd.f32 %v2129, %v2132
      %vm2134 = vweird.f32 %v1831
      %vm2135 = vweird.f32 %v2129
      %vm2136 = vmor %vm2134, %vm2135
      %v2137 = vsel %vm2136, %v2129, %v2133
      %v2138 = vand.u32 2147483647, %v1831
      %vm2139 = vcmp.eq.f32.partialorder %v2138, 8.507059e+37
      %v2140 = vand.u32 %v1831, 2147483648
      %v2141 = vor.u32 1.1754944e-38, %v2140
      %v2142 = vsel %vm2139, %v2141, %v2137
      %v2143 = vmul.f32 1.0, %v2142
      %v2144 = vrcp.pop %v1832
      %v2145 = vmul.f32 %v1832, %v2144
      %v2146 = vsub.f32 1.0, %v2145
      %v2147 = vmul.f32 %v2144, %v2146
      %v2148 = vadd.f32 %v2144, %v2147
      %vm2149 = vweird.f32 %v1832
      %vm2150 = vweird.f32 %v2144
      %vm2151 = vmor %vm2149, %vm2150
      %v2152 = vsel %vm2151, %v2144, %v2148
      %v2153 = vand.u32 2147483647, %v1832
      %vm2154 = vcmp.eq.f32.partialorder %v2153, 8.507059e+37
      %v2155 = vand.u32 %v1832, 2147483648
      %v2156 = vor.u32 1.1754944e-38, %v2155
      %v2157 = vsel %vm2154, %v2156, %v2152
      %v2158 = vmul.f32 1.0, %v2157
      %v2159 = vrcp.pop %v1833
      %v2160 = vmul.f32 %v1833, %v2159
      %v2161 = vsub.f32 1.0, %v2160
      %v2162 = vmul.f32 %v2159, %v2161
      %v2163 = vadd.f32 %v2159, %v2162
      %vm2164 = vweird.f32 %v1833
      %vm2165 = vweird.f32 %v2159
      %vm2166 = vmor %vm2164, %vm2165
      %v2167 = vsel %vm2166, %v2159, %v2163
      %v2168 = vand.u32 2147483647, %v1833
      %vm2169 = vcmp.eq.f32.partialorder %v2168, 8.507059e+37
      %v2170 = vand.u32 %v1833, 2147483648
      %v2171 = vor.u32 1.1754944e-38, %v2170
      %v2172 = vsel %vm2169, %v2171, %v2167
      %v2173 = vmul.f32 1.0, %v2172
      %v2174 = vrcp.pop %v1834
      %v2175 = vmul.f32 %v1834, %v2174
      %v2176 = vsub.f32 1.0, %v2175
      %v2177 = vmul.f32 %v2174, %v2176
      %v2178 = vadd.f32 %v2174, %v2177
      %vm2179 = vweird.f32 %v1834
      %vm2180 = vweird.f32 %v2174
      %vm2181 = vmor %vm2179, %vm2180
      %v2182 = vsel %vm2181, %v2174, %v2178
      %v2183 = vand.u32 2147483647, %v1834
      %vm2184 = vcmp.eq.f32.partialorder %v2183, 8.507059e+37
      %v2185 = vand.u32 %v1834, 2147483648
      %v2186 = vor.u32 1.1754944e-38, %v2185
      %v2187 = vsel %vm2184, %v2186, %v2182
      %v2188 = vmul.f32 1.0, %v2187
      %v2189 = vrcp.pop %v1835
      %v2190 = vmul.f32 %v1835, %v2189
      %v2191 = vsub.f32 1.0, %v2190
      %v2192 = vmul.f32 %v2189, %v2191
      %v2193 = vadd.f32 %v2189, %v2192
      %vm2194 = vweird.f32 %v1835
      %vm2195 = vweird.f32 %v2189
      %vm2196 = vmor %vm2194, %vm2195
      %v2197 = vsel %vm2196, %v2189, %v2193
      %v2198 = vand.u32 2147483647, %v1835
      %vm2199 = vcmp.eq.f32.partialorder %v2198, 8.507059e+37
      %v2200 = vand.u32 %v1835, 2147483648
      %v2201 = vor.u32 1.1754944e-38, %v2200
      %v2202 = vsel %vm2199, %v2201, %v2197
      %v2203 = vmul.f32 1.0, %v2202
      %v2204 = vrcp.pop %v1836
      %v2205 = vmul.f32 %v1836, %v2204
      %v2206 = vsub.f32 1.0, %v2205
      %v2207 = vmul.f32 %v2204, %v2206
      %v2208 = vadd.f32 %v2204, %v2207
      %vm2209 = vweird.f32 %v1836
      %vm2210 = vweird.f32 %v2204
      %vm2211 = vmor %vm2209, %vm2210
      %v2212 = vsel %vm2211, %v2204, %v2208
      %v2213 = vand.u32 2147483647, %v1836
      %vm2214 = vcmp.eq.f32.partialorder %v2213, 8.507059e+37
      %v2215 = vand.u32 %v1836, 2147483648
      %v2216 = vor.u32 1.1754944e-38, %v2215
      %v2217 = vsel %vm2214, %v2216, %v2212
      %v2218 = vmul.f32 1.0, %v2217
      %v2219 = vrcp.pop %v1837
      %v2220 = vmul.f32 %v1837, %v2219
      %v2221 = vsub.f32 1.0, %v2220
      %v2222 = vmul.f32 %v2219, %v2221
      %v2223 = vadd.f32 %v2219, %v2222
      %vm2224 = vweird.f32 %v1837
      %vm2225 = vweird.f32 %v2219
      %vm2226 = vmor %vm2224, %vm2225
      %v2227 = vsel %vm2226, %v2219, %v2223
      %v2228 = vand.u32 2147483647, %v1837
      %vm2229 = vcmp.eq.f32.partialorder %v2228, 8.507059e+37
      %v2230 = vand.u32 %v1837, 2147483648
      %v2231 = vor.u32 1.1754944e-38, %v2230
      %v2232 = vsel %vm2229, %v2231, %v2227
      %v2233 = vmul.f32 1.0, %v2232
      %v2234 = vrcp.pop %v1838
      %v2235 = vmul.f32 %v1838, %v2234
      %v2236 = vsub.f32 1.0, %v2235
      %v2237 = vmul.f32 %v2234, %v2236
      %v2238 = vadd.f32 %v2234, %v2237
      %vm2239 = vweird.f32 %v1838
      %vm2240 = vweird.f32 %v2234
      %vm2241 = vmor %vm2239, %vm2240
      %v2242 = vsel %vm2241, %v2234, %v2238
      %v2243 = vand.u32 2147483647, %v1838
      %vm2244 = vcmp.eq.f32.partialorder %v2243, 8.507059e+37
      %v2245 = vand.u32 %v1838, 2147483648
      %v2246 = vor.u32 1.1754944e-38, %v2245
      %v2247 = vsel %vm2244, %v2246, %v2242
      %v2248 = vmul.f32 1.0, %v2247
      %v2249 = vrcp.pop %v1839
      %v2250 = vmul.f32 %v1839, %v2249
      %v2251 = vsub.f32 1.0, %v2250
      %v2252 = vmul.f32 %v2249, %v2251
      %v2253 = vadd.f32 %v2249, %v2252
      %vm2254 = vweird.f32 %v1839
      %vm2255 = vweird.f32 %v2249
      %vm2256 = vmor %vm2254, %vm2255
      %v2257 = vsel %vm2256, %v2249, %v2253
      %v2258 = vand.u32 2147483647, %v1839
      %vm2259 = vcmp.eq.f32.partialorder %v2258, 8.507059e+37
      %v2260 = vand.u32 %v1839, 2147483648
      %v2261 = vor.u32 1.1754944e-38, %v2260
      %v2262 = vsel %vm2259, %v2261, %v2257
      %v2263 = vmul.f32 1.0, %v2262
      %v2264 = vrcp.pop %v1840
      %v2265 = vmul.f32 %v1840, %v2264
      %v2266 = vsub.f32 1.0, %v2265
      %v2267 = vmul.f32 %v2264, %v2266
      %v2268 = vadd.f32 %v2264, %v2267
      %vm2269 = vweird.f32 %v1840
      %vm2270 = vweird.f32 %v2264
      %vm2271 = vmor %vm2269, %vm2270
      %v2272 = vsel %vm2271, %v2264, %v2268
      %v2273 = vand.u32 2147483647, %v1840
      %vm2274 = vcmp.eq.f32.partialorder %v2273, 8.507059e+37
      %v2275 = vand.u32 %v1840, 2147483648
      %v2276 = vor.u32 1.1754944e-38, %v2275
      %v2277 = vsel %vm2274, %v2276, %v2272
      %v2278 = vmul.f32 1.0, %v2277
      %v2279 = vrcp.pop %v1841
      %v2280 = vmul.f32 %v1841, %v2279
      %v2281 = vsub.f32 1.0, %v2280
      %v2282 = vmul.f32 %v2279, %v2281
      %v2283 = vadd.f32 %v2279, %v2282
      %vm2284 = vweird.f32 %v1841
      %vm2285 = vweird.f32 %v2279
      %vm2286 = vmor %vm2284, %vm2285
      %v2287 = vsel %vm2286, %v2279, %v2283
      %v2288 = vand.u32 2147483647, %v1841
      %vm2289 = vcmp.eq.f32.partialorder %v2288, 8.507059e+37
      %v2290 = vand.u32 %v1841, 2147483648
      %v2291 = vor.u32 1.1754944e-38, %v2290
      %v2292 = vsel %vm2289, %v2291, %v2287
      %v2293 = vmul.f32 1.0, %v2292
      %v2294 = vrcp.pop %v1842
      %v2295 = vmul.f32 %v1842, %v2294
      %v2296 = vsub.f32 1.0, %v2295
      %v2297 = vmul.f32 %v2294, %v2296
      %v2298 = vadd.f32 %v2294, %v2297
      %vm2299 = vweird.f32 %v1842
      %vm2300 = vweird.f32 %v2294
      %vm2301 = vmor %vm2299, %vm2300
      %v2302 = vsel %vm2301, %v2294, %v2298
      %v2303 = vand.u32 2147483647, %v1842
      %vm2304 = vcmp.eq.f32.partialorder %v2303, 8.507059e+37
      %v2305 = vand.u32 %v1842, 2147483648
      %v2306 = vor.u32 1.1754944e-38, %v2305
      %v2307 = vsel %vm2304, %v2306, %v2302
      %v2308 = vmul.f32 1.0, %v2307
      %v2309 = vrcp.pop %v1843
      %v2310 = vmul.f32 %v1843, %v2309
      %v2311 = vsub.f32 1.0, %v2310
      %v2312 = vmul.f32 %v2309, %v2311
      %v2313 = vadd.f32 %v2309, %v2312
      %vm2314 = vweird.f32 %v1843
      %vm2315 = vweird.f32 %v2309
      %vm2316 = vmor %vm2314, %vm2315
      %v2317 = vsel %vm2316, %v2309, %v2313
      %v2318 = vand.u32 2147483647, %v1843
      %vm2319 = vcmp.eq.f32.partialorder %v2318, 8.507059e+37
      %v2320 = vand.u32 %v1843, 2147483648
      %v2321 = vor.u32 1.1754944e-38, %v2320
      %v2322 = vsel %vm2319, %v2321, %v2317
      %v2323 = vmul.f32 1.0, %v2322
      %v2324 = vld [vmem:[%s7] sm:$0xff]
      %v2325 = vld [vmem:[%s7 + $0x8] sm:$0xff]
      %v2326 = vld [vmem:[%s7 + $0x10] sm:$0xff]
      %v2327 = vld [vmem:[%s7 + $0x18] sm:$0xff]
      %v2328 = vld [vmem:[%s8] sm:$0x1]
      %v2330 = vperm.slane %v2328, 0
      %v2333 = vsel %vm1506, %v1858, 0
      %v2336 = vsel %vm1506, %v1873, 0
      %v2339 = vsel %vm1506, %v1888, 0
      %v2342 = vsel %vm1506, %v1903, 0
      %v2345 = vsel %vm1506, %v1918, 0
      %v2348 = vsel %vm1506, %v1933, 0
      %v2351 = vsel %vm1506, %v1948, 0
      %v2354 = vsel %vm1506, %v1963, 0
      %v2357 = vsel %vm1506, %v1978, 0
      %v2360 = vsel %vm1506, %v1993, 0
      %v2363 = vsel %vm1506, %v2008, 0
      %v2366 = vsel %vm1506, %v2023, 0
      %v2369 = vsel %vm1506, %v2038, 0
      %v2372 = vsel %vm1506, %v2053, 0
      %v2375 = vsel %vm1506, %v2068, 0
      %v2378 = vsel %vm1506, %v2083, 0
      %v2381 = vsel %vm1506, %v2098, 0
      %v2384 = vsel %vm1506, %v2113, 0
      %v2387 = vsel %vm1506, %v2128, 0
      %v2390 = vsel %vm1506, %v2143, 0
      %v2393 = vsel %vm1506, %v2158, 0
      %v2396 = vsel %vm1506, %v2173, 0
      %v2399 = vsel %vm1506, %v2188, 0
      %v2402 = vsel %vm1506, %v2203, 0
      %v2405 = vsel %vm1506, %v2218, 0
      %v2408 = vsel %vm1506, %v2233, 0
      %v2411 = vsel %vm1506, %v2248, 0
      %v2414 = vsel %vm1506, %v2263, 0
      %v2417 = vsel %vm1506, %v2278, 0
      %v2420 = vsel %vm1506, %v2293, 0
      %v2423 = vsel %vm1506, %v2308, 0
      %v2426 = vsel %vm1506, %v2323, 0
      %2428 = vmatpush.msra.mxu0 0.0
      %2429 = vmatpush.msra.mxu0 0.0
      %2430 = vmatpush.msra.mxu0 0.0
      %2431 = vmatpush.msra.mxu0 0.0
      %2432 = vmatpush.msra.mxu0 0.0
      %2433 = vmatpush.msra.mxu0 0.0
      %2434 = vmatpush.msra.mxu0 0.0
      %2435 = vmatpush.msra.mxu0 0.0
      %2436 = vmatpush.msra.mxu0 0.0
      %2437 = vmatpush.msra.mxu0 0.0
      %2438 = vmatpush.msra.mxu0 0.0
      %2439 = vmatpush.msra.mxu0 0.0
      %2440 = vmatpush.msra.mxu0 %v2327
      %2441 = vmatpush.msra.mxu0 %v2326
      %2442 = vmatpush.msra.mxu0 %v2325
      %2443 = vmatpush.msra.mxu0 %v2324
      %2444 = vmatmul.f32.gmra.mxu0 %v2333
      %v2445 = vpop.f32.mrf.mxu0
      %v2446 = vadd.f32 %v2330, %v2445
      %2447 = vmatmul.f32.gmra.mxu0 %v2336
      %v2448 = vpop.f32.mrf.mxu0
      %v2449 = vadd.f32 %v2330, %v2448
      %2450 = vmatmul.f32.gmra.mxu0 %v2339
      %v2451 = vpop.f32.mrf.mxu0
      %v2452 = vadd.f32 %v2330, %v2451
      %2453 = vmatmul.f32.gmra.mxu0 %v2342
      %v2454 = vpop.f32.mrf.mxu0
      %v2455 = vadd.f32 %v2330, %v2454
      %2456 = vmatmul.f32.gmra.mxu0 %v2345
      %v2457 = vpop.f32.mrf.mxu0
      %v2458 = vadd.f32 %v2330, %v2457
      %2459 = vmatmul.f32.gmra.mxu0 %v2348
      %v2460 = vpop.f32.mrf.mxu0
      %v2461 = vadd.f32 %v2330, %v2460
      %2462 = vmatmul.f32.gmra.mxu0 %v2351
      %v2463 = vpop.f32.mrf.mxu0
      %v2464 = vadd.f32 %v2330, %v2463
      %2465 = vmatmul.f32.gmra.mxu0 %v2354
      %v2466 = vpop.f32.mrf.mxu0
      %v2467 = vadd.f32 %v2330, %v2466
      %2468 = vmatmul.f32.gmra.mxu0 %v2357
      %v2469 = vpop.f32.mrf.mxu0
      %v2470 = vadd.f32 %v2330, %v2469
      %2471 = vmatmul.f32.gmra.mxu0 %v2360
      %v2472 = vpop.f32.mrf.mxu0
      %v2473 = vadd.f32 %v2330, %v2472
      %2474 = vmatmul.f32.gmra.mxu0 %v2363
      %v2475 = vpop.f32.mrf.mxu0
      %v2476 = vadd.f32 %v2330, %v2475
      %2477 = vmatmul.f32.gmra.mxu0 %v2366
      %v2478 = vpop.f32.mrf.mxu0
      %v2479 = vadd.f32 %v2330, %v2478
      %2480 = vmatmul.f32.gmra.mxu0 %v2369
      %v2481 = vpop.f32.mrf.mxu0
      %v2482 = vadd.f32 %v2330, %v2481
      %2483 = vmatmul.f32.gmra.mxu0 %v2372
      %v2484 = vpop.f32.mrf.mxu0
      %v2485 = vadd.f32 %v2330, %v2484
      %2486 = vmatmul.f32.gmra.mxu0 %v2375
      %v2487 = vpop.f32.mrf.mxu0
      %v2488 = vadd.f32 %v2330, %v2487
      %2489 = vmatmul.f32.gmra.mxu0 %v2378
      %v2490 = vpop.f32.mrf.mxu0
      %v2491 = vadd.f32 %v2330, %v2490
      %2492 = vmatmul.f32.gmra.mxu0 %v2381
      %v2493 = vpop.f32.mrf.mxu0
      %v2494 = vadd.f32 %v2330, %v2493
      %2495 = vmatmul.f32.gmra.mxu0 %v2384
      %v2496 = vpop.f32.mrf.mxu0
      %v2497 = vadd.f32 %v2330, %v2496
      %2498 = vmatmul.f32.gmra.mxu0 %v2387
      %v2499 = vpop.f32.mrf.mxu0
      %v2500 = vadd.f32 %v2330, %v2499
      %2501 = vmatmul.f32.gmra.mxu0 %v2390
      %v2502 = vpop.f32.mrf.mxu0
      %v2503 = vadd.f32 %v2330, %v2502
      %2504 = vmatmul.f32.gmra.mxu0 %v2393
      %v2505 = vpop.f32.mrf.mxu0
      %v2506 = vadd.f32 %v2330, %v2505
      %2507 = vmatmul.f32.gmra.mxu0 %v2396
      %v2508 = vpop.f32.mrf.mxu0
      %v2509 = vadd.f32 %v2330, %v2508
      %2510 = vmatmul.f32.gmra.mxu0 %v2399
      %v2511 = vpop.f32.mrf.mxu0
      %v2512 = vadd.f32 %v2330, %v2511
      %2513 = vmatmul.f32.gmra.mxu0 %v2402
      %v2514 = vpop.f32.mrf.mxu0
      %v2515 = vadd.f32 %v2330, %v2514
      %2516 = vmatmul.f32.gmra.mxu0 %v2405
      %v2517 = vpop.f32.mrf.mxu0
      %v2518 = vadd.f32 %v2330, %v2517
      %2519 = vmatmul.f32.gmra.mxu0 %v2408
      %v2520 = vpop.f32.mrf.mxu0
      %v2521 = vadd.f32 %v2330, %v2520
      %2522 = vmatmul.f32.gmra.mxu0 %v2411
      %v2523 = vpop.f32.mrf.mxu0
      %v2524 = vadd.f32 %v2330, %v2523
      %2525 = vmatmul.f32.gmra.mxu0 %v2414
      %v2526 = vpop.f32.mrf.mxu0
      %v2527 = vadd.f32 %v2330, %v2526
      %2528 = vmatmul.f32.gmra.mxu0 %v2417
      %v2529 = vpop.f32.mrf.mxu0
      %v2530 = vadd.f32 %v2330, %v2529
      %2531 = vmatmul.f32.gmra.mxu0 %v2420
      %v2532 = vpop.f32.mrf.mxu0
      %v2533 = vadd.f32 %v2330, %v2532
      %2534 = vmatmul.f32.gmra.mxu0 %v2423
      %v2535 = vpop.f32.mrf.mxu0
      %v2536 = vadd.f32 %v2330, %v2535
      %2537 = vmatmul.f32.gmra.mxu0 %v2426
      %v2538 = vpop.f32.mrf.mxu0
      %v2539 = vadd.f32 %v2330, %v2538
      %2540 = vdwg.mxu0
      %vm2541 = vcmask 64512
      %2542 = vst.msk [vmem:[%s356] sm:$0xff] %vm2541, %v2446
      %2543 = vst.msk [vmem:[%s356 + $0x8] sm:$0xff] %vm2541, %v2449
      %2544 = vst.msk [vmem:[%s356 + $0x10] sm:$0xff] %vm2541, %v2452
      %2545 = vst.msk [vmem:[%s356 + $0x18] sm:$0xff] %vm2541, %v2455
      %2546 = vst.msk [vmem:[%s356 + $0x20] sm:$0xff] %vm2541, %v2458
      %2547 = vst.msk [vmem:[%s356 + $0x28] sm:$0xff] %vm2541, %v2461
      %2548 = vst.msk [vmem:[%s356 + $0x30] sm:$0xff] %vm2541, %v2464
      %2549 = vst.msk [vmem:[%s356 + $0x38] sm:$0xff] %vm2541, %v2467
      %2550 = vst.msk [vmem:[%s356 + $0x40] sm:$0xff] %vm2541, %v2470
      %2551 = vst.msk [vmem:[%s356 + $0x48] sm:$0xff] %vm2541, %v2473
      %2552 = vst.msk [vmem:[%s356 + $0x50] sm:$0xff] %vm2541, %v2476
      %2553 = vst.msk [vmem:[%s356 + $0x58] sm:$0xff] %vm2541, %v2479
      %2554 = vst.msk [vmem:[%s356 + $0x60] sm:$0xff] %vm2541, %v2482
      %2555 = vst.msk [vmem:[%s356 + $0x68] sm:$0xff] %vm2541, %v2485
      %2556 = vst.msk [vmem:[%s356 + $0x70] sm:$0xff] %vm2541, %v2488
      %2557 = vst.msk [vmem:[%s356 + $0x78] sm:$0xff] %vm2541, %v2491
      %2558 = vst.msk [vmem:[%s356 + $0x80] sm:$0xff] %vm2541, %v2494
      %2559 = vst.msk [vmem:[%s356 + $0x88] sm:$0xff] %vm2541, %v2497
      %2560 = vst.msk [vmem:[%s356 + $0x90] sm:$0xff] %vm2541, %v2500
      %2561 = vst.msk [vmem:[%s356 + $0x98] sm:$0xff] %vm2541, %v2503
      %2562 = vst.msk [vmem:[%s356 + $0xa0] sm:$0xff] %vm2541, %v2506
      %2563 = vst.msk [vmem:[%s356 + $0xa8] sm:$0xff] %vm2541, %v2509
      %2564 = vst.msk [vmem:[%s356 + $0xb0] sm:$0xff] %vm2541, %v2512
      %2565 = vst.msk [vmem:[%s356 + $0xb8] sm:$0xff] %vm2541, %v2515
      %2566 = vst.msk [vmem:[%s356 + $0xc0] sm:$0xff] %vm2541, %v2518
      %2567 = vst.msk [vmem:[%s356 + $0xc8] sm:$0xff] %vm2541, %v2521
      %2568 = vst.msk [vmem:[%s356 + $0xd0] sm:$0xff] %vm2541, %v2524
      %2569 = vst.msk [vmem:[%s356 + $0xd8] sm:$0xff] %vm2541, %v2527
      %2570 = vst.msk [vmem:[%s356 + $0xe0] sm:$0xff] %vm2541, %v2530
      %2571 = vst.msk [vmem:[%s356 + $0xe8] sm:$0xff] %vm2541, %v2533
      %2572 = vst.msk [vmem:[%s356 + $0xf0] sm:$0xff] %vm2541, %v2536
      %2573 = vst.msk [vmem:[%s356 + $0xf8] sm:$0xff] %vm2541, %v2539
      %s2574 = smul.u32 32, %s20
      %p2575 = scmp.lt.s32.totalorder %s2574, 63
      %s2576 = scalar_select %p2575, %s2574, 63
      %s2577 = smul.addr %s2576, 8
      %s2578 = scalar_lea.vmem %s9, %s2577
      // Predicated region
      $region57: #{tpu_custom_call.1} parent=55 // pred_check
        %p2579 = pneg %p237
      $region58: #{tpu_custom_call.1} parent=55 // pred_check_branch
        %2581 = sbr.rel (%p2579) target = $region60
      $region59: #{tpu_custom_call.1} parent=55 // pred_region
        %s2582 = smul.u32 32, %s20
      $region60: #{tpu_custom_call.1} parent=55 // pred_fallthru
        _
    $region56: #{tpu_custom_call.1} parent=5 // pred_fallthru
      _
    %p2583 = scmp.le.s32.totalorder 2, %s15
    // Predicated region
    $region61: #{tpu_custom_call.1} parent=5 // pred_check
      %p2584 = pneg %p2583
    $region62: #{tpu_custom_call.1} parent=5 // pred_check_branch
      %2586 = sbr.rel (%p2584) target = $region64
    $region63: #{tpu_custom_call.1} parent=5 // pred_region
      %s2587 = ssub.s32 %s15, 2
      // Predicated region
      $region65: #{tpu_custom_call.1} parent=63 // pred_check
        %p2588 = pneg %p243
      $region66: #{tpu_custom_call.1} parent=63 // pred_check_branch
        %2590 = sbr.rel (%p2588) target = $region68
      $region67: #{tpu_custom_call.1} parent=63 // pred_region
        %s2591 = smul.u32 32, %s21
        %p2592 = scmp.lt.s32.totalorder %s2591, 63
        %s2593 = scalar_select %p2592, %s2591, 63
        %s2594 = smul.addr %s2593, 8
        %s2595 = scalar_lea.vmem %s9, %s2594
      $region68: #{tpu_custom_call.1} parent=63 // pred_fallthru
        _
    $region64: #{tpu_custom_call.1} parent=5 // pred_fallthru
      _
  $region6: #{tpu_custom_call.1} parent=0 // loop_footer
    %s19 = sadd.s32 1, %s15
  $region7: #{tpu_custom_call.1} parent=0 // loop_footer_branch
    %14 = sbr.rel target = $region3
  $region8: #{tpu_custom_call.1} parent=0 // loop_exit
    _

</llo_original>
